<compile_context>
chip_gen: v7x
topology: tpu7x:2x2x1
jax: 0.10.0
libtpu: 0.0.40
codegen_flags: <defaults>
</compile_context>

<pallas_src>
import numpy as np
import jax
import jax.numpy as jnp
from jax.experimental import pallas as pl
from jax.experimental.pallas import tpu as pltpu

# ----------------------------- configuration --------------------------------
B = 2                  # batch
N_SEGS = 32            # raw input segments per image
N_VERT_LINES = 8       # opt.n_vert_lines (L)
N_VERT_PTS = 16        # opt.n_vert_pts   (P)
N_INLIER_ZVPS = 4      # opt.n_inlier_zvps
ICH = 3                # homogeneous coords
CH_INST = 64           # opt.ch_inst
CH_GLOBAL = 128        # opt.ch_global
H1, H2, H3 = 128, 64, 32
BN_EPS = 1e-5

BP = B * N_VERT_PTS    # 32 batch-folded points
BL = B * N_VERT_LINES  # 16 batch-folded lines
LANES = 128

# packed-data row offsets (all multiples of 8)
D_VPTS_N = 0
D_VLINES_N = BP
D_VPTS = BP + BL
DATA_ROWS = BP + BL + BP          # 80

# fused output slab: rows 0..BP-1 -> lane0 = prob logits, lane1 = sigmoid(softmax)
#                    rows BP..BP+B-1 -> zvp in lanes 0..2
OUT_ROWS = BP + 8                 # 40 (multiple of 8)

# ------------------------- packed weight slab layout -------------------------
_W_SHAPES = (
    ("pf_w1", (ICH, 64)), ("pf_b1", (1, 64)),
    ("pf_w2", (64, CH_INST)), ("pf_b2", (1, CH_INST)),
    ("lf_w1", (ICH, 64)), ("lf_b1", (1, 64)),
    ("lf_w2", (64, CH_INST)), ("lf_b2", (1, CH_INST)),
    ("lf_w3", (CH_INST, CH_GLOBAL)), ("lf_b3", (1, CH_GLOBAL)),
    ("pp_w1a", (CH_INST, H1)), ("pp_w1b", (CH_GLOBAL, H1)), ("pp_b1", (1, H1)),
    ("pp_w2", (H1, H2)), ("pp_b2", (1, H2)),
    ("pp_w3", (H2, H3)), ("pp_b3", (1, H3)),
    ("pp_w4t", (1, H3)),           # final 1-channel conv, stored transposed
    ("pp_b4", (1, 1)),
)


def _round8(n):
    return -(-n // 8) * 8


def _build_layout():
    layout, off = {}, 0
    for name, (r, _c) in _W_SHAPES:
        layout[name] = (off, r, _c)
        off += _round8(r)            # keep every tensor sublane-tile aligned
    return layout, off


W_LAYOUT, W_ROWS = _build_layout()   # W_ROWS = 672 -> (672, 128) f32 = ~344 KB


# ------------------------------ Pallas kernel --------------------------------
def gpnet_vert_kernel(data_ref, w_ref, out_ref):
    f32 = jnp.float32
    P, L = N_VERT_PTS, N_VERT_LINES

    def w(name):
        off, r, c = W_LAYOUT[name]
        return w_ref[off:off + r, 0:c]          # static, tile-aligned slice

    def dense(x, wname, bname, relu=True):
        y = jnp.dot(x, w(wname), preferred_element_type=f32) + w(bname)
        return jnp.maximum(y, 0.0) if relu else y

    def first_layer(row0, rows, wname, bname):
        # K=3 contraction on the VPU: 3 broadcast FMAs instead of a padded MXU
        # matmul (keeps the MXU free for the 64/128-wide layers).
        woff, _, c = W_LAYOUT[wname]
        y = (data_ref[row0:row0 + rows, 0:1] * w_ref[woff + 0:woff + 1, 0:c]
             + data_ref[row0:row0 + rows, 1:2] * w_ref[woff + 1:woff + 2, 0:c]
             + data_ref[row0:row0 + rows, 2:3] * w_ref[woff + 2:woff + 3, 0:c]
             + w(bname))
        return jnp.maximum(y, 0.0)

    # ---- pointfeat: per-point MLP (batch folded into M = B*P rows) ----
    h = first_layer(D_VPTS_N, BP, "pf_w1", "pf_b1")           # (BP, 64)
    pts_inst = dense(h, "pf_w2", "pf_b2")                     # (BP, CH_INST)

    # ---- linefeat: per-line MLP + per-batch max-pooled global feature ----
    hl = first_layer(D_VLINES_N, BL, "lf_w1", "lf_b1")        # (BL, 64)
    l_inst = dense(hl, "lf_w2", "lf_b2")                      # (BL, CH_INST)
    l3 = dense(l_inst, "lf_w3", "lf_b3", relu=False)          # (BL, CH_GLOBAL)

    # global-feature half of pointprob layer 1, broadcast back to this batch's points
    gc_rows = []
    for b in range(B):                                        # B = 2, static unroll
        g_b = jnp.max(l3[b * L:(b + 1) * L, :], axis=0, keepdims=True)   # (1, CH_GLOBAL)
        gc_b = jnp.dot(g_b, w("pp_w1b"), preferred_element_type=f32)     # (1, H1)
        gc_rows.append(jnp.broadcast_to(gc_b, (P, H1)))
    gc_pp = jnp.concatenate(gc_rows, axis=0)                  # (BP, H1), 8-aligned concat

    # ---- pointprob: concat([inst, global]) @ W1 folded into a split matmul ----
    hp = jnp.maximum(
        jnp.dot(pts_inst, w("pp_w1a"), preferred_element_type=f32) + gc_pp + w("pp_b1"),
        0.0)                                                  # (BP, H1)
    hp = dense(hp, "pp_w2", "pp_b2")                          # (BP, H2)
    hp = dense(hp, "pp_w3", "pp_b3")                          # (BP, H3)
    # final 1-channel projection: VPU multiply + lane reduction (keeps N=1 off the MXU)
    prob = jnp.sum(hp * w("pp_w4t"), axis=1, keepdims=True) + w("pp_b4")   # (BP, 1)

    # ---- per-batch softmax over points, weighted zvp, sigmoid of weights ----
    out_ref[BP:OUT_ROWS, :] = jnp.zeros((OUT_ROWS - BP, LANES), f32)
    lane = jax.lax.broadcasted_iota(jnp.int32, (P, LANES), 1)
    for b in range(B):                                        # static unroll, 8-aligned rows
        pb = prob[b * P:(b + 1) * P, :]                       # (P, 1)
        m = jnp.max(pb, axis=0, keepdims=True)
        e = jnp.exp(pb - m)
        wsm = e * pl.reciprocal(jnp.sum(e, axis=0, keepdims=True), approx=True)
        # vpts rows were lane-padded with zeros, so the weighted sum already is a
        # full 128-lane row with zvp in lanes 0..2 (no narrow stores needed).
        vb = data_ref[D_VPTS + b * P:D_VPTS + (b + 1) * P, :]             # (P, 128)
        zvp_row = jnp.sum(wsm * vb, axis=0, keepdims=True)                # (1, 128)
        sig = pl.reciprocal(1.0 + jnp.exp(-wsm), approx=True)             # sigmoid(softmax)
        blk = jnp.where(lane == 0, jnp.broadcast_to(pb, (P, LANES)),
              jnp.where(lane == 1, jnp.broadcast_to(sig, (P, LANES)),
                        jnp.zeros((P, LANES), f32)))
        out_ref[b * P:(b + 1) * P, :] = blk                   # full-lane unmasked store
        out_ref[BP + b:BP + b + 1, :] = zvp_row


def run_gpnet_heads(vpts_n, vlines_n, vpts, wslab):
    # pack the three (., ., 3) data tensors into one lane-dense slab -> one DMA
    data = jnp.concatenate([vpts_n.reshape(BP, ICH),
                            vlines_n.reshape(BL, ICH),
                            vpts.reshape(BP, ICH)], axis=0)               # (80, 3)
    data = jnp.pad(data, ((0, 0), (0, LANES - ICH))).astype(jnp.float32)  # (80, 128)

    out = pl.pallas_call(
        gpnet_vert_kernel,
        out_shape=jax.ShapeDtypeStruct((OUT_ROWS, LANES), jnp.float32),
        in_specs=[pl.BlockSpec(memory_space=pltpu.MemorySpace.VMEM),
                  pl.BlockSpec(memory_space=pltpu.MemorySpace.VMEM)],
        out_specs=pl.BlockSpec(memory_space=pltpu.MemorySpace.VMEM),
    )(data, wslab)

    prob = out[0:BP, 0].reshape(B, N_VERT_PTS, 1)     # pre-softmax logits
    sig = out[0:BP, 1].reshape(B, N_VERT_PTS)         # sigmoid(softmax(prob))
    zvp = out[BP:BP + B, 0:ICH]                       # (B, 3)
    return prob, zvp, sig


# ---------------------- parameter init (deterministic) -----------------------
def init_conv_bn(key, cin, cout):
    """Conv1d(k=1) + BatchNorm1d folded (eval mode) -> (W, b)."""
    kw, kc, kg, kbeta, km, kv = jax.random.split(key, 6)
    W = jax.random.normal(kw, (cin, cout), jnp.float32) / jnp.sqrt(cin)
    c = 0.02 * jax.random.normal(kc, (cout,), jnp.float32)
    gamma = 1.0 + 0.1 * jax.random.normal(kg, (cout,), jnp.float32)
    beta = 0.1 * jax.random.normal(kbeta, (cout,), jnp.float32)
    mean = 0.1 * jax.random.normal(km, (cout,), jnp.float32)
    var = 1.0 + 0.1 * jax.random.uniform(kv, (cout,), jnp.float32)
    g = gamma / jnp.sqrt(var + BN_EPS)
    return W * g[None, :], ((c - mean) * g + beta).reshape(1, cout)


def init_conv(key, cin, cout):
    kw, kb = jax.random.split(key)
    W = jax.random.normal(kw, (cin, cout), jnp.float32) / jnp.sqrt(cin)
    b = 0.02 * jax.random.normal(kb, (cout,), jnp.float32)
    return W, b.reshape(1, cout)


def init_params(key):
    keys = jax.random.split(key, 9)
    p = {}
    p["pf_w1"], p["pf_b1"] = init_conv_bn(keys[0], ICH, 64)
    p["pf_w2"], p["pf_b2"] = init_conv_bn(keys[1], 64, CH_INST)
    p["lf_w1"], p["lf_b1"] = init_conv_bn(keys[2], ICH, 64)
    p["lf_w2"], p["lf_b2"] = init_conv_bn(keys[3], 64, CH_INST)
    p["lf_w3"], p["lf_b3"] = init_conv_bn(keys[4], CH_INST, CH_GLOBAL)
    w1, p["pp_b1"] = init_conv_bn(keys[5], CH_INST + CH_GLOBAL, H1)
    p["pp_w1a"], p["pp_w1b"] = w1[:CH_INST], w1[CH_INST:]
    p["pp_w2"], p["pp_b2"] = init_conv_bn(keys[6], H1, H2)
    p["pp_w3"], p["pp_b3"] = init_conv_bn(keys[7], H2, H3)
    w4, p["pp_b4"] = init_conv(keys[8], H3, 1)
    p["pp_w4t"] = w4.T                                   # (1, H3)
    return p


def pack_weights(params):
    """Pack all weights/biases into one lane-dense (W_ROWS, 128) f32 slab."""
    slab = np.zeros((W_ROWS, LANES), np.float32)
    for name, (r, c) in _W_SHAPES:
        off = W_LAYOUT[name][0]
        slab[off:off + r, :c] = np.asarray(params[name], np.float32)
    return jnp.asarray(slab)


# --------------------- geometric preprocessing (JAX glue) --------------------
def l2_normalize(x, eps=1e-12):
    return x / jnp.maximum(jnp.linalg.norm(x, axis=-1, keepdims=True), eps)


def init_filter_vert_segs(segs, n_lines):
    # segs: (B, N, 4) = (x1, y1, x2, y2); keep the n_lines most vertical ones.
    dx = segs[..., 2] - segs[..., 0]
    dy = segs[..., 3] - segs[..., 1]
    vert_score = jnp.abs(dy) / (jnp.sqrt(dx * dx + dy * dy) + 1e-8)
    _, idx = jax.lax.top_k(vert_score, n_lines)                    # (B, n_lines)
    gather_idx = jnp.broadcast_to(idx[..., None], idx.shape + (4,))
    return jnp.take_along_axis(segs, gather_idx, axis=1)


def segs2lines(segs, focal=1.0):
    ones = jnp.full(segs.shape[:-1] + (1,), focal, segs.dtype)
    p1 = jnp.concatenate([segs[..., 0:2], ones], axis=-1)
    p2 = jnp.concatenate([segs[..., 2:4], ones], axis=-1)
    return l2_normalize(jnp.cross(p1, p2))


def generate_inter_pts(lines1, lines2, n_pts):
    L = lines1.shape[1]
    idx = jnp.arange(n_pts)
    i = idx % L
    j = (i + 1 + (idx // L)) % L        # deterministic distinct pairings
    return jnp.cross(lines1[:, i, :], lines2[:, j, :])


def pick_hyps(vpts, pts_prob, k):
    _, idx = jax.lax.top_k(pts_prob, k)                            # (B, k)
    gather_idx = jnp.broadcast_to(idx[..., None], idx.shape + (3,))
    return jnp.take_along_axis(vpts, gather_idx, axis=1)


# --------------------------------- forward ----------------------------------
@jax.jit
def gpnet_vert_forward(segs, wslab):
    out = {}
    vsegs = init_filter_vert_segs(segs, N_VERT_LINES)
    out['vert/segs'] = vsegs
    vlines = segs2lines(vsegs, focal=1.0)
    out['vert/lines'] = vlines
    vpts = generate_inter_pts(vlines, vlines, N_VERT_PTS)
    out['vert/pts'] = vpts

    vpts_n = l2_normalize(vpts)        # channels-last; no transpose needed
    vlines_n = l2_normalize(vlines)

    prob, zvp, sig = run_gpnet_heads(vpts_n, vlines_n, vpts, wslab)
    out['vert/pts_prob'] = prob                      # (B, P, 1)
    out['zvp'] = zvp                                 # (B, 3)
    out['zvps'] = pick_hyps(vpts, sig, N_INLIER_ZVPS)   # (B, k, 3)
    return out


if __name__ == "__main__":
    key = jax.random.PRNGKey(0)
    k_segs, k_params = jax.random.split(key)
    segs = jax.random.normal(k_segs, (B, N_SEGS, 4), jnp.float32)
    params = init_params(k_params)
    wslab = pack_weights(params)       # one-time packing into a single DMA-able slab

    out = gpnet_vert_forward(segs, wslab)
    jax.block_until_ready(out)

    assert out['vert/pts_prob'].shape == (B, N_VERT_PTS, 1)
    assert out['zvp'].shape == (B, 3)
    assert out['zvps'].shape == (B, N_INLIER_ZVPS, 3)
    print("KERNEL_OK")
</pallas_src>

<mosaic_0001>
module attributes {stable_mosaic.version = 11 : i64} {
  func.func @gpnet_vert_kernel(%arg0: memref<80x128xf32, #tpu.memory_space<vmem>>, %arg1: memref<672x128xf32, #tpu.memory_space<vmem>>, %arg2: memref<40x128xf32, #tpu.memory_space<vmem>>) attributes {dimension_semantics = [], scalar_prefetch = 0 : i64, scratch_operands = 0 : i64, tpu.core_type = #tpu.core_type<tc>} {
    %c0 = arith.constant 0 : index
    %c0_0 = arith.constant 0 : index
    %0 = vector.load %arg0[%c0, %c0_0] : memref<80x128xf32, #tpu.memory_space<vmem>>, vector<32x1xf32>
    %c0_1 = arith.constant 0 : index
    %c0_2 = arith.constant 0 : index
    %1 = vector.load %arg1[%c0_1, %c0_2] : memref<672x128xf32, #tpu.memory_space<vmem>>, vector<1x64xf32>
    %2 = vector.broadcast %0 : vector<32x1xf32> to vector<32x64xf32>
    %3 = vector.broadcast %1 : vector<1x64xf32> to vector<32x64xf32>
    %4 = arith.mulf %2, %3 : vector<32x64xf32>
    %c0_3 = arith.constant 0 : index
    %c1 = arith.constant 1 : index
    %5 = vector.load %arg0[%c0_3, %c1] : memref<80x128xf32, #tpu.memory_space<vmem>>, vector<32x1xf32>
    %c1_4 = arith.constant 1 : index
    %c0_5 = arith.constant 0 : index
    %6 = vector.load %arg1[%c1_4, %c0_5] : memref<672x128xf32, #tpu.memory_space<vmem>>, vector<1x64xf32>
    %7 = vector.broadcast %5 : vector<32x1xf32> to vector<32x64xf32>
    %8 = vector.broadcast %6 : vector<1x64xf32> to vector<32x64xf32>
    %9 = arith.mulf %7, %8 : vector<32x64xf32>
    %10 = arith.addf %4, %9 : vector<32x64xf32>
    %c0_6 = arith.constant 0 : index
    %c2 = arith.constant 2 : index
    %11 = vector.load %arg0[%c0_6, %c2] : memref<80x128xf32, #tpu.memory_space<vmem>>, vector<32x1xf32>
    %c2_7 = arith.constant 2 : index
    %c0_8 = arith.constant 0 : index
    %12 = vector.load %arg1[%c2_7, %c0_8] : memref<672x128xf32, #tpu.memory_space<vmem>>, vector<1x64xf32>
    %13 = vector.broadcast %11 : vector<32x1xf32> to vector<32x64xf32>
    %14 = vector.broadcast %12 : vector<1x64xf32> to vector<32x64xf32>
    %15 = arith.mulf %13, %14 : vector<32x64xf32>
    %16 = arith.addf %10, %15 : vector<32x64xf32>
    %c8 = arith.constant 8 : index
    %c0_9 = arith.constant 0 : index
    %17 = vector.load %arg1[%c8, %c0_9] : memref<672x128xf32, #tpu.memory_space<vmem>>, vector<1x64xf32>
    %18 = vector.broadcast %17 : vector<1x64xf32> to vector<32x64xf32>
    %19 = arith.addf %16, %18 : vector<32x64xf32>
    %cst = arith.constant 0.000000e+00 : f32
    %20 = vector.broadcast %cst : f32 to vector<32x64xf32>
    %21 = arith.maximumf %19, %20 : vector<32x64xf32>
    %c16 = arith.constant 16 : index
    %c0_10 = arith.constant 0 : index
    %22 = vector.load %arg1[%c16, %c0_10] : memref<672x128xf32, #tpu.memory_space<vmem>>, vector<64x64xf32>
    %cst_11 = arith.constant dense<0.000000e+00> : vector<32x64xf32>
    %23 = tpu.matmul %21, %22, %cst_11 {dimension_numbers = #tpu.dot_dimension_numbers<[1], [0], [0], [1], [0, 0, 1, 1], [], []>} : vector<32x64xf32>, vector<64x64xf32>, vector<32x64xf32> -> vector<32x64xf32>
    %c80 = arith.constant 80 : index
    %c0_12 = arith.constant 0 : index
    %24 = vector.load %arg1[%c80, %c0_12] : memref<672x128xf32, #tpu.memory_space<vmem>>, vector<1x64xf32>
    %25 = vector.broadcast %24 : vector<1x64xf32> to vector<32x64xf32>
    %26 = arith.addf %23, %25 : vector<32x64xf32>
    %cst_13 = arith.constant 0.000000e+00 : f32
    %27 = vector.broadcast %cst_13 : f32 to vector<32x64xf32>
    %28 = arith.maximumf %26, %27 : vector<32x64xf32>
    %c32 = arith.constant 32 : index
    %c0_14 = arith.constant 0 : index
    %29 = vector.load %arg0[%c32, %c0_14] : memref<80x128xf32, #tpu.memory_space<vmem>>, vector<16x1xf32>
    %c88 = arith.constant 88 : index
    %c0_15 = arith.constant 0 : index
    %30 = vector.load %arg1[%c88, %c0_15] : memref<672x128xf32, #tpu.memory_space<vmem>>, vector<1x64xf32>
    %31 = vector.broadcast %29 : vector<16x1xf32> to vector<16x64xf32>
    %32 = vector.broadcast %30 : vector<1x64xf32> to vector<16x64xf32>
    %33 = arith.mulf %31, %32 : vector<16x64xf32>
    %c32_16 = arith.constant 32 : index
    %c1_17 = arith.constant 1 : index
    %34 = vector.load %arg0[%c32_16, %c1_17] : memref<80x128xf32, #tpu.memory_space<vmem>>, vector<16x1xf32>
    %c89 = arith.constant 89 : index
    %c0_18 = arith.constant 0 : index
    %35 = vector.load %arg1[%c89, %c0_18] : memref<672x128xf32, #tpu.memory_space<vmem>>, vector<1x64xf32>
    %36 = vector.broadcast %34 : vector<16x1xf32> to vector<16x64xf32>
    %37 = vector.broadcast %35 : vector<1x64xf32> to vector<16x64xf32>
    %38 = arith.mulf %36, %37 : vector<16x64xf32>
    %39 = arith.addf %33, %38 : vector<16x64xf32>
    %c32_19 = arith.constant 32 : index
    %c2_20 = arith.constant 2 : index
    %40 = vector.load %arg0[%c32_19, %c2_20] : memref<80x128xf32, #tpu.memory_space<vmem>>, vector<16x1xf32>
    %c90 = arith.constant 90 : index
    %c0_21 = arith.constant 0 : index
    %41 = vector.load %arg1[%c90, %c0_21] : memref<672x128xf32, #tpu.memory_space<vmem>>, vector<1x64xf32>
    %42 = vector.broadcast %40 : vector<16x1xf32> to vector<16x64xf32>
    %43 = vector.broadcast %41 : vector<1x64xf32> to vector<16x64xf32>
    %44 = arith.mulf %42, %43 : vector<16x64xf32>
    %45 = arith.addf %39, %44 : vector<16x64xf32>
    %c96 = arith.constant 96 : index
    %c0_22 = arith.constant 0 : index
    %46 = vector.load %arg1[%c96, %c0_22] : memref<672x128xf32, #tpu.memory_space<vmem>>, vector<1x64xf32>
    %47 = vector.broadcast %46 : vector<1x64xf32> to vector<16x64xf32>
    %48 = arith.addf %45, %47 : vector<16x64xf32>
    %cst_23 = arith.constant 0.000000e+00 : f32
    %49 = vector.broadcast %cst_23 : f32 to vector<16x64xf32>
    %50 = arith.maximumf %48, %49 : vector<16x64xf32>
    %c104 = arith.constant 104 : index
    %c0_24 = arith.constant 0 : index
    %51 = vector.load %arg1[%c104, %c0_24] : memref<672x128xf32, #tpu.memory_space<vmem>>, vector<64x64xf32>
    %cst_25 = arith.constant dense<0.000000e+00> : vector<16x64xf32>
    %52 = tpu.matmul %50, %51, %cst_25 {dimension_numbers = #tpu.dot_dimension_numbers<[1], [0], [0], [1], [0, 0, 1, 1], [], []>} : vector<16x64xf32>, vector<64x64xf32>, vector<16x64xf32> -> vector<16x64xf32>
    %c168 = arith.constant 168 : index
    %c0_26 = arith.constant 0 : index
    %53 = vector.load %arg1[%c168, %c0_26] : memref<672x128xf32, #tpu.memory_space<vmem>>, vector<1x64xf32>
    %54 = vector.broadcast %53 : vector<1x64xf32> to vector<16x64xf32>
    %55 = arith.addf %52, %54 : vector<16x64xf32>
    %cst_27 = arith.constant 0.000000e+00 : f32
    %56 = vector.broadcast %cst_27 : f32 to vector<16x64xf32>
    %57 = arith.maximumf %55, %56 : vector<16x64xf32>
    %c176 = arith.constant 176 : index
    %c0_28 = arith.constant 0 : index
    %58 = vector.load %arg1[%c176, %c0_28] : memref<672x128xf32, #tpu.memory_space<vmem>>, vector<64x128xf32>
    %cst_29 = arith.constant dense<0.000000e+00> : vector<16x128xf32>
    %59 = tpu.matmul %57, %58, %cst_29 {dimension_numbers = #tpu.dot_dimension_numbers<[1], [0], [0], [1], [0, 0, 1, 1], [], []>} : vector<16x64xf32>, vector<64x128xf32>, vector<16x128xf32> -> vector<16x128xf32>
    %c240 = arith.constant 240 : index
    %c0_30 = arith.constant 0 : index
    %60 = vector.load %arg1[%c240, %c0_30] : memref<672x128xf32, #tpu.memory_space<vmem>>, vector<1x128xf32>
    %61 = vector.broadcast %60 : vector<1x128xf32> to vector<16x128xf32>
    %62 = arith.addf %59, %61 : vector<16x128xf32>
    %63 = vector.extract_strided_slice %62 {offsets = [0, 0], sizes = [8, 128], strides = [1, 1]} : vector<16x128xf32> to vector<8x128xf32>
    %cst_31 = arith.constant dense<0xFF800000> : vector<128xf32>
    %64 = vector.multi_reduction <maximumf>, %63, %cst_31 [0] : vector<8x128xf32> to vector<128xf32>
    %65 = vector.shape_cast %64 : vector<128xf32> to vector<1x128xf32>
    %c312 = arith.constant 312 : index
    %c0_32 = arith.constant 0 : index
    %66 = vector.load %arg1[%c312, %c0_32] : memref<672x128xf32, #tpu.memory_space<vmem>>, vector<128x128xf32>
    %cst_33 = arith.constant dense<0.000000e+00> : vector<1x128xf32>
    %67 = tpu.matmul %65, %66, %cst_33 {dimension_numbers = #tpu.dot_dimension_numbers<[1], [0], [0], [1], [0, 0, 1, 1], [], []>} : vector<1x128xf32>, vector<128x128xf32>, vector<1x128xf32> -> vector<1x128xf32>
    %68 = vector.shape_cast %67 : vector<1x128xf32> to vector<1x128xf32>
    %69 = vector.broadcast %68 : vector<1x128xf32> to vector<16x128xf32>
    %70 = vector.extract_strided_slice %62 {offsets = [8, 0], sizes = [8, 128], strides = [1, 1]} : vector<16x128xf32> to vector<8x128xf32>
    %cst_34 = arith.constant dense<0xFF800000> : vector<128xf32>
    %71 = vector.multi_reduction <maximumf>, %70, %cst_34 [0] : vector<8x128xf32> to vector<128xf32>
    %72 = vector.shape_cast %71 : vector<128xf32> to vector<1x128xf32>
    %c312_35 = arith.constant 312 : index
    %c0_36 = arith.constant 0 : index
    %73 = vector.load %arg1[%c312_35, %c0_36] : memref<672x128xf32, #tpu.memory_space<vmem>>, vector<128x128xf32>
    %cst_37 = arith.constant dense<0.000000e+00> : vector<1x128xf32>
    %74 = tpu.matmul %72, %73, %cst_37 {dimension_numbers = #tpu.dot_dimension_numbers<[1], [0], [0], [1], [0, 0, 1, 1], [], []>} : vector<1x128xf32>, vector<128x128xf32>, vector<1x128xf32> -> vector<1x128xf32>
    %75 = vector.shape_cast %74 : vector<1x128xf32> to vector<1x128xf32>
    %76 = vector.broadcast %75 : vector<1x128xf32> to vector<16x128xf32>
    %77 = tpu.concatenate %69, %76 in 0 : vector<16x128xf32>, vector<16x128xf32> -> vector<32x128xf32>
    %c248 = arith.constant 248 : index
    %c0_38 = arith.constant 0 : index
    %78 = vector.load %arg1[%c248, %c0_38] : memref<672x128xf32, #tpu.memory_space<vmem>>, vector<64x128xf32>
    %cst_39 = arith.constant dense<0.000000e+00> : vector<32x128xf32>
    %79 = tpu.matmul %28, %78, %cst_39 {dimension_numbers = #tpu.dot_dimension_numbers<[1], [0], [0], [1], [0, 0, 1, 1], [], []>} : vector<32x64xf32>, vector<64x128xf32>, vector<32x128xf32> -> vector<32x128xf32>
    %80 = arith.addf %79, %77 : vector<32x128xf32>
    %c440 = arith.constant 440 : index
    %c0_40 = arith.constant 0 : index
    %81 = vector.load %arg1[%c440, %c0_40] : memref<672x128xf32, #tpu.memory_space<vmem>>, vector<1x128xf32>
    %82 = vector.broadcast %81 : vector<1x128xf32> to vector<32x128xf32>
    %83 = arith.addf %80, %82 : vector<32x128xf32>
    %cst_41 = arith.constant 0.000000e+00 : f32
    %84 = vector.broadcast %cst_41 : f32 to vector<32x128xf32>
    %85 = arith.maximumf %83, %84 : vector<32x128xf32>
    %c448 = arith.constant 448 : index
    %c0_42 = arith.constant 0 : index
    %86 = vector.load %arg1[%c448, %c0_42] : memref<672x128xf32, #tpu.memory_space<vmem>>, vector<128x64xf32>
    %cst_43 = arith.constant dense<0.000000e+00> : vector<32x64xf32>
    %87 = tpu.matmul %85, %86, %cst_43 {dimension_numbers = #tpu.dot_dimension_numbers<[1], [0], [0], [1], [0, 0, 1, 1], [], []>} : vector<32x128xf32>, vector<128x64xf32>, vector<32x64xf32> -> vector<32x64xf32>
    %c576 = arith.constant 576 : index
    %c0_44 = arith.constant 0 : index
    %88 = vector.load %arg1[%c576, %c0_44] : memref<672x128xf32, #tpu.memory_space<vmem>>, vector<1x64xf32>
    %89 = vector.broadcast %88 : vector<1x64xf32> to vector<32x64xf32>
    %90 = arith.addf %87, %89 : vector<32x64xf32>
    %cst_45 = arith.constant 0.000000e+00 : f32
    %91 = vector.broadcast %cst_45 : f32 to vector<32x64xf32>
    %92 = arith.maximumf %90, %91 : vector<32x64xf32>
    %c584 = arith.constant 584 : index
    %c0_46 = arith.constant 0 : index
    %93 = vector.load %arg1[%c584, %c0_46] : memref<672x128xf32, #tpu.memory_space<vmem>>, vector<64x32xf32>
    %cst_47 = arith.constant dense<0.000000e+00> : vector<32x32xf32>
    %94 = tpu.matmul %92, %93, %cst_47 {dimension_numbers = #tpu.dot_dimension_numbers<[1], [0], [0], [1], [0, 0, 1, 1], [], []>} : vector<32x64xf32>, vector<64x32xf32>, vector<32x32xf32> -> vector<32x32xf32>
    %c648 = arith.constant 648 : index
    %c0_48 = arith.constant 0 : index
    %95 = vector.load %arg1[%c648, %c0_48] : memref<672x128xf32, #tpu.memory_space<vmem>>, vector<1x32xf32>
    %96 = vector.broadcast %95 : vector<1x32xf32> to vector<32x32xf32>
    %97 = arith.addf %94, %96 : vector<32x32xf32>
    %cst_49 = arith.constant 0.000000e+00 : f32
    %98 = vector.broadcast %cst_49 : f32 to vector<32x32xf32>
    %99 = arith.maximumf %97, %98 : vector<32x32xf32>
    %c656 = arith.constant 656 : index
    %c0_50 = arith.constant 0 : index
    %100 = vector.load %arg1[%c656, %c0_50] : memref<672x128xf32, #tpu.memory_space<vmem>>, vector<1x32xf32>
    %101 = vector.broadcast %100 : vector<1x32xf32> to vector<32x32xf32>
    %102 = arith.mulf %99, %101 : vector<32x32xf32>
    %cst_51 = arith.constant dense<0.000000e+00> : vector<32xf32>
    %103 = vector.multi_reduction <add>, %102, %cst_51 [1] : vector<32x32xf32> to vector<32xf32>
    %104 = vector.shape_cast %103 : vector<32xf32> to vector<32x1xf32>
    %c664 = arith.constant 664 : index
    %c0_52 = arith.constant 0 : index
    %105 = vector.load %arg1[%c664, %c0_52] : memref<672x128xf32, #tpu.memory_space<vmem>>, vector<1x1xf32>
    %106 = vector.broadcast %105 : vector<1x1xf32> to vector<32x1xf32>
    %107 = arith.addf %104, %106 : vector<32x1xf32>
    %cst_53 = arith.constant 0.000000e+00 : f32
    %108 = vector.broadcast %cst_53 : f32 to vector<8x128xf32>
    %c32_54 = arith.constant 32 : index
    %c0_55 = arith.constant 0 : index
    %109 = vector.load %arg2[%c32_54, %c0_55] : memref<40x128xf32, #tpu.memory_space<vmem>>, vector<8x128xf32>
    tpu.vector_store %arg2[%c32_54, %c0_55], %108 {strides = array<i32>} : memref<40x128xf32, #tpu.memory_space<vmem>>, vector<8x128xf32>,
    %110 = tpu.iota {dimensions = array<i32: 1>} : vector<16x128xi32>
    %111 = vector.extract_strided_slice %107 {offsets = [0, 0], sizes = [16, 1], strides = [1, 1]} : vector<32x1xf32> to vector<16x1xf32>
    %cst_56 = arith.constant dense<0xFF800000> : vector<1xf32>
    %112 = vector.multi_reduction <maximumf>, %111, %cst_56 [0] : vector<16x1xf32> to vector<1xf32>
    %113 = vector.shape_cast %112 : vector<1xf32> to vector<1x1xf32>
    %114 = vector.broadcast %113 : vector<1x1xf32> to vector<16x1xf32>
    %115 = arith.subf %111, %114 : vector<16x1xf32>
    %116 = math.exp %115 : vector<16x1xf32>
    %cst_57 = arith.constant dense<0.000000e+00> : vector<1xf32>
    %117 = vector.multi_reduction <add>, %116, %cst_57 [0] : vector<16x1xf32> to vector<1xf32>
    %118 = vector.shape_cast %117 : vector<1xf32> to vector<1x1xf32>
    %119 = tpu.reciprocal %118 {approx = true} : vector<1x1xf32> -> vector<1x1xf32>
    %120 = vector.broadcast %119 : vector<1x1xf32> to vector<16x1xf32>
    %121 = arith.mulf %116, %120 : vector<16x1xf32>
    %c48 = arith.constant 48 : index
    %c0_58 = arith.constant 0 : index
    %122 = vector.load %arg0[%c48, %c0_58] : memref<80x128xf32, #tpu.memory_space<vmem>>, vector<16x128xf32>
    %123 = vector.broadcast %121 : vector<16x1xf32> to vector<16x128xf32>
    %124 = arith.mulf %123, %122 : vector<16x128xf32>
    %cst_59 = arith.constant dense<0.000000e+00> : vector<128xf32>
    %125 = vector.multi_reduction <add>, %124, %cst_59 [0] : vector<16x128xf32> to vector<128xf32>
    %126 = vector.shape_cast %125 : vector<128xf32> to vector<1x128xf32>
    %cst_60 = arith.constant 0.000000e+00 : f32
    %127 = vector.broadcast %cst_60 : f32 to vector<16x1xf32>
    %128 = arith.subf %127, %121 : vector<16x1xf32>
    %129 = math.exp %128 : vector<16x1xf32>
    %cst_61 = arith.constant 1.000000e+00 : f32
    %130 = vector.broadcast %cst_61 : f32 to vector<16x1xf32>
    %131 = arith.addf %130, %129 : vector<16x1xf32>
    %132 = tpu.reciprocal %131 {approx = true} : vector<16x1xf32> -> vector<16x1xf32>
    %c0_i32 = arith.constant 0 : i32
    %133 = vector.broadcast %c0_i32 : i32 to vector<16x128xi32>
    %134 = arith.cmpi eq, %110, %133 : vector<16x128xi32>
    %135 = vector.shape_cast %111 : vector<16x1xf32> to vector<16x1xf32>
    %136 = vector.broadcast %135 : vector<16x1xf32> to vector<16x128xf32>
    %c1_i32 = arith.constant 1 : i32
    %137 = vector.broadcast %c1_i32 : i32 to vector<16x128xi32>
    %138 = arith.cmpi eq, %110, %137 : vector<16x128xi32>
    %139 = vector.shape_cast %132 : vector<16x1xf32> to vector<16x1xf32>
    %140 = vector.broadcast %139 : vector<16x1xf32> to vector<16x128xf32>
    %cst_62 = arith.constant 0.000000e+00 : f32
    %141 = vector.broadcast %cst_62 : f32 to vector<16x128xf32>
    %142 = arith.select %138, %140, %141 : vector<16x128xi1>, vector<16x128xf32>
    %143 = arith.select %134, %136, %142 : vector<16x128xi1>, vector<16x128xf32>
    %c0_63 = arith.constant 0 : index
    %c0_64 = arith.constant 0 : index
    %144 = vector.load %arg2[%c0_63, %c0_64] : memref<40x128xf32, #tpu.memory_space<vmem>>, vector<16x128xf32>
    tpu.vector_store %arg2[%c0_63, %c0_64], %143 {strides = array<i32>} : memref<40x128xf32, #tpu.memory_space<vmem>>, vector<16x128xf32>,
    %c32_65 = arith.constant 32 : index
    %c0_66 = arith.constant 0 : index
    %145 = vector.load %arg2[%c32_65, %c0_66] : memref<40x128xf32, #tpu.memory_space<vmem>>, vector<1x128xf32>
    tpu.vector_store %arg2[%c32_65, %c0_66], %126 {strides = array<i32>} : memref<40x128xf32, #tpu.memory_space<vmem>>, vector<1x128xf32>,
    %146 = vector.extract_strided_slice %107 {offsets = [16, 0], sizes = [16, 1], strides = [1, 1]} : vector<32x1xf32> to vector<16x1xf32>
    %cst_67 = arith.constant dense<0xFF800000> : vector<1xf32>
    %147 = vector.multi_reduction <maximumf>, %146, %cst_67 [0] : vector<16x1xf32> to vector<1xf32>
    %148 = vector.shape_cast %147 : vector<1xf32> to vector<1x1xf32>
    %149 = vector.broadcast %148 : vector<1x1xf32> to vector<16x1xf32>
    %150 = arith.subf %146, %149 : vector<16x1xf32>
    %151 = math.exp %150 : vector<16x1xf32>
    %cst_68 = arith.constant dense<0.000000e+00> : vector<1xf32>
    %152 = vector.multi_reduction <add>, %151, %cst_68 [0] : vector<16x1xf32> to vector<1xf32>
    %153 = vector.shape_cast %152 : vector<1xf32> to vector<1x1xf32>
    %154 = tpu.reciprocal %153 {approx = true} : vector<1x1xf32> -> vector<1x1xf32>
    %155 = vector.broadcast %154 : vector<1x1xf32> to vector<16x1xf32>
    %156 = arith.mulf %151, %155 : vector<16x1xf32>
    %c64 = arith.constant 64 : index
    %c0_69 = arith.constant 0 : index
    %157 = vector.load %arg0[%c64, %c0_69] : memref<80x128xf32, #tpu.memory_space<vmem>>, vector<16x128xf32>
    %158 = vector.broadcast %156 : vector<16x1xf32> to vector<16x128xf32>
    %159 = arith.mulf %158, %157 : vector<16x128xf32>
    %cst_70 = arith.constant dense<0.000000e+00> : vector<128xf32>
    %160 = vector.multi_reduction <add>, %159, %cst_70 [0] : vector<16x128xf32> to vector<128xf32>
    %161 = vector.shape_cast %160 : vector<128xf32> to vector<1x128xf32>
    %cst_71 = arith.constant 0.000000e+00 : f32
    %162 = vector.broadcast %cst_71 : f32 to vector<16x1xf32>
    %163 = arith.subf %162, %156 : vector<16x1xf32>
    %164 = math.exp %163 : vector<16x1xf32>
    %cst_72 = arith.constant 1.000000e+00 : f32
    %165 = vector.broadcast %cst_72 : f32 to vector<16x1xf32>
    %166 = arith.addf %165, %164 : vector<16x1xf32>
    %167 = tpu.reciprocal %166 {approx = true} : vector<16x1xf32> -> vector<16x1xf32>
    %c0_i32_73 = arith.constant 0 : i32
    %168 = vector.broadcast %c0_i32_73 : i32 to vector<16x128xi32>
    %169 = arith.cmpi eq, %110, %168 : vector<16x128xi32>
    %170 = vector.shape_cast %146 : vector<16x1xf32> to vector<16x1xf32>
    %171 = vector.broadcast %170 : vector<16x1xf32> to vector<16x128xf32>
    %c1_i32_74 = arith.constant 1 : i32
    %172 = vector.broadcast %c1_i32_74 : i32 to vector<16x128xi32>
    %173 = arith.cmpi eq, %110, %172 : vector<16x128xi32>
    %174 = vector.shape_cast %167 : vector<16x1xf32> to vector<16x1xf32>
    %175 = vector.broadcast %174 : vector<16x1xf32> to vector<16x128xf32>
    %cst_75 = arith.constant 0.000000e+00 : f32
    %176 = vector.broadcast %cst_75 : f32 to vector<16x128xf32>
    %177 = arith.select %173, %175, %176 : vector<16x128xi1>, vector<16x128xf32>
    %178 = arith.select %169, %171, %177 : vector<16x128xi1>, vector<16x128xf32>
    %c16_76 = arith.constant 16 : index
    %c0_77 = arith.constant 0 : index
    %179 = vector.load %arg2[%c16_76, %c0_77] : memref<40x128xf32, #tpu.memory_space<vmem>>, vector<16x128xf32>
    tpu.vector_store %arg2[%c16_76, %c0_77], %178 {strides = array<i32>} : memref<40x128xf32, #tpu.memory_space<vmem>>, vector<16x128xf32>,
    %c33 = arith.constant 33 : index
    %c0_78 = arith.constant 0 : index
    %180 = vector.load %arg2[%c33, %c0_78] : memref<40x128xf32, #tpu.memory_space<vmem>>, vector<1x128xf32>
    tpu.vector_store %arg2[%c33, %c0_78], %161 {strides = array<i32>} : memref<40x128xf32, #tpu.memory_space<vmem>>, vector<1x128xf32>,
    return
  }
}

</mosaic_0001>

<llo_original>
// kernel: squeeze.35
$region0: #{squeeze.35}
  %s0 = inlined_call_operand.vmem [shape: f32[32], index: 0, kind: input, shape index: {}]
  %s1 = inlined_call_operand.vmem [shape: f32[2,16], index: 1, kind: output, shape index: {}]
  $region1: #{squeeze.35} parent=0
    #allocation0 [shape = 'u8[4096]{0}', space=vmem, size = 0x1000, scoped, tag = 'scoped mem for output reshape']
    #allocation1 [shape = 'u8[4096]{0}', space=vmem, size = 0x1000, scoped, tag = 'scoped mem for input reshape']
    %s3 = sshllo.u32 0, 1
    %v4 = vld [vmem:[%s0] sm:%s3]
    %5 = vst [vmem:[#allocation1] sm:%s3] %v4
    %v6 = vld [vmem:[#allocation1] sm:$0x1]
    %vm7 = vcmask 130048
    %8 = vst.msk [vmem:[#allocation0] sm:$0x1] %vm7, %v6
    %v9 = vld [vmem:[#allocation1] sm:$0x1]
    %10 = vrot.lane.b32.xlu0 %v9, 112
    %v11 = vpop.permute.xlu0 %10
    %vm12 = vcmask 130048
    %s13 = scalar_lea.vmem [#allocation0], 1
    %14 = vst.msk [vmem:[%s13] sm:$0x1] %vm12, %v11
    %s16 = sshllo.u32 0, 2
    %v18 = vld [vmem:[#allocation0] sm:%s16]
    %s19 = sshllo.u32 0, 2
    %20 = vst [vmem:[%s1] sm:%s19] %v18

// kernel: squeeze.34
$region0: #{squeeze.34}
  %s0 = inlined_call_operand.vmem [shape: f32[32], index: 0, kind: input, shape index: {}]
  %s1 = inlined_call_operand.hbm [shape: f32[2,16,1], index: 1, kind: output, shape index: {}]
  $region1: #{squeeze.34} parent=0
    #allocation0 [shape = 'u8[1024]{0}', space=vmem, size = 0x400, scoped, tag = 'operand span for operand 1']
    #allocation1 [shape = 's32[1]{0}', space=sflag, size = 0x4, scoped, tag = 'scoped memory for squeeze.34']
    #allocation2 [shape = 'u8[4096]{0}', space=vmem, size = 0x1000, scoped, tag = 'scoped mem for output reshape']
    #allocation3 [shape = 'u8[4096]{0}', space=vmem, size = 0x1000, scoped, tag = 'scoped mem for input reshape']
    %2 = vsyncpa [#allocation1], 0
    %s4 = sshllo.u32 0, 1
    %v5 = vld [vmem:[%s0] sm:%s4]
    %6 = vst [vmem:[#allocation3] sm:%s4] %v5
    %v7 = vld [vmem:[#allocation3] sm:$0x1]
    %vm8 = vcmask 130048
    %9 = vst.msk [vmem:[#allocation2] sm:$0x1] %vm8, %v7
    %v10 = vld [vmem:[#allocation3] sm:$0x1]
    %11 = vrot.lane.b32.xlu0 %v10, 112
    %v12 = vpop.permute.xlu0 %11
    %vm13 = vcmask 130048
    %s14 = scalar_lea.vmem [#allocation2], 1
    %15 = vst.msk [vmem:[%s14] sm:$0x1] %vm13, %v12
    %s17 = sshllo.u32 0, 2
    %v19 = vld [vmem:[#allocation2] sm:%s17]
    %s20 = sshllo.u32 0, 2
    %21 = vst [vmem:[#allocation0] sm:%s20] %v19
    %s23 = ssub.s32 32, 32
    %24 = vsyncadd [#allocation1], %s23
    %s26 = sshll.u32 [#allocation0], 4
    %s27 = int_to_ptr.vmem [resolvable:$true] %s26
    %29 = dma.vmem_to_hbm [thread:$0]  %s27, 32, %s1, [#allocation1]
    %30 = dma.done [#allocation1], 32
    %31 = vsyncpa [#allocation1], 1

// kernel: gpnet_vert_forward.1
$region0: #{gpnet_vert_forward.1}
  #allocation0 [shape = 'u32[]', space=smem, size = 0x4, offset = 0x4, fixed_abs, tag = 'smem constant byte address 0x4 - core index']
  #allocation1 [shape = 'u32[144,128]{1,0:T(1,128)}', space=vmem, size = 0x12000, scoped, tag = 'internal scratch']
  %s0 = inlined_call_operand.vmem [shape: f32[80,128], index: 0, kind: input, shape index: {}]
  %s1 = inlined_call_operand.vmem [shape: f32[672,128], index: 1, kind: input, shape index: {}]
  %s2 = inlined_call_operand.vmem [shape: f32[40,128], index: 2, kind: output, shape index: {}]
  %s3 = sld [smem:[#allocation0]]
  $region18: #{gpnet_vert_forward.1} parent=0
    _
  %s5 = ssub.s32 1, %s3
  %s6 = scalar_select 0, %s5, %s3
  // Predicated region
  $region2: #{gpnet_vert_forward.1} parent=0 // pred_check
    _
  $region3: #{gpnet_vert_forward.1} parent=0 // pred_check_branch
    %8 = sbr.rel (0) target = $region5
  $region4: #{gpnet_vert_forward.1} parent=0 // pred_region
    _
  $region5: #{gpnet_vert_forward.1} parent=0 // pred_fallthru
    _
  // Predicated region
  $region6: #{gpnet_vert_forward.1} parent=0 // pred_check
    _
  $region7: #{gpnet_vert_forward.1} parent=0 // pred_check_branch
    %10 = sbr.rel (0) target = $region9
  $region8: #{gpnet_vert_forward.1} parent=0 // pred_region
    _
  $region9: #{gpnet_vert_forward.1} parent=0 // pred_fallthru
    _
  %v11 = vld [vmem:[%s0] sm:$0xff]
  %v12 = vld [vmem:[%s0 + $0x8] sm:$0xff]
  %v13 = vld [vmem:[%s0 + $0x10] sm:$0xff]
  %v14 = vld [vmem:[%s0 + $0x18] sm:$0xff]
  %v15 = vld [vmem:[%s1] sm:$0x1]
  %17 = vset.pattern.permute.xlu0 0
  %18 = vperm.xlu0 %17, %v11
  %v19 = vpop.permute.xlu0 %18
  %22 = vset.pattern.permute.xlu0 0
  %23 = vperm.xlu0 %22, %v12
  %v24 = vpop.permute.xlu0 %23
  %27 = vset.pattern.permute.xlu0 0
  %28 = vperm.xlu0 %27, %v13
  %v29 = vpop.permute.xlu0 %28
  %32 = vset.pattern.permute.xlu0 0
  %33 = vperm.xlu0 %32, %v14
  %v34 = vpop.permute.xlu0 %33
  %v36 = vlaneseq
  %v37 = vshrl.u32 %v36, 7
  %v38 = vsub.s32 0, %v37
  %v39 = vrot.slane %v15, %v38
  %v40 = vmul.f32 %v19, %v39
  %v41 = vmul.f32 %v24, %v39
  %v42 = vmul.f32 %v29, %v39
  %v43 = vmul.f32 %v34, %v39
  %v44 = vld [vmem:[%s1 + $0x1] sm:$0x1]
  %45 = vset.pattern.permute.xlu0 1
  %46 = vperm.xlu0 %45, %v11
  %v47 = vpop.permute.xlu0 %46
  %49 = vset.pattern.permute.xlu0 1
  %50 = vperm.xlu0 %49, %v12
  %v51 = vpop.permute.xlu0 %50
  %53 = vset.pattern.permute.xlu0 1
  %54 = vperm.xlu0 %53, %v13
  %v55 = vpop.permute.xlu0 %54
  %57 = vset.pattern.permute.xlu0 1
  %58 = vperm.xlu0 %57, %v14
  %v59 = vpop.permute.xlu0 %58
  %v61 = vlaneseq
  %v62 = vshrl.u32 %v61, 7
  %v63 = vsub.s32 0, %v62
  %v64 = vrot.slane %v44, %v63
  %v65 = vmul.f32 %v47, %v64
  %v66 = vmul.f32 %v51, %v64
  %v67 = vmul.f32 %v55, %v64
  %v68 = vmul.f32 %v59, %v64
  %v69 = vadd.f32 %v40, %v65
  %v70 = vadd.f32 %v41, %v66
  %v71 = vadd.f32 %v42, %v67
  %v72 = vadd.f32 %v43, %v68
  %v73 = vld [vmem:[%s1 + $0x2] sm:$0x1]
  %74 = vset.pattern.permute.xlu0 2
  %75 = vperm.xlu0 %74, %v11
  %v76 = vpop.permute.xlu0 %75
  %78 = vset.pattern.permute.xlu0 2
  %79 = vperm.xlu0 %78, %v12
  %v80 = vpop.permute.xlu0 %79
  %82 = vset.pattern.permute.xlu0 2
  %83 = vperm.xlu0 %82, %v13
  %v84 = vpop.permute.xlu0 %83
  %86 = vset.pattern.permute.xlu0 2
  %87 = vperm.xlu0 %86, %v14
  %v88 = vpop.permute.xlu0 %87
  %v90 = vlaneseq
  %v91 = vshrl.u32 %v90, 7
  %v92 = vsub.s32 0, %v91
  %v93 = vrot.slane %v73, %v92
  %v94 = vmul.f32 %v76, %v93
  %v95 = vmul.f32 %v80, %v93
  %v96 = vmul.f32 %v84, %v93
  %v97 = vmul.f32 %v88, %v93
  %v98 = vadd.f32 %v69, %v94
  %v99 = vadd.f32 %v70, %v95
  %v100 = vadd.f32 %v71, %v96
  %v101 = vadd.f32 %v72, %v97
  %v102 = vld [vmem:[%s1 + $0x8] sm:$0x1]
  %v103 = vlaneseq
  %v104 = vshrl.u32 %v103, 7
  %v105 = vsub.s32 0, %v104
  %v106 = vrot.slane %v102, %v105
  %v107 = vadd.f32 %v98, %v106
  %v108 = vadd.f32 %v99, %v106
  %v109 = vadd.f32 %v100, %v106
  %v110 = vadd.f32 %v101, %v106
  %v111 = vmax.f32 %v107, 0.0
  %v112 = vmax.f32 %v108, 0.0
  %v113 = vmax.f32 %v109, 0.0
  %v114 = vmax.f32 %v110, 0.0
  %v115 = vld [vmem:[%s1 + $0x10] sm:$0xff]
  %v116 = vld [vmem:[%s1 + $0x18] sm:$0xff]
  %v117 = vld [vmem:[%s1 + $0x20] sm:$0xff]
  %v118 = vld [vmem:[%s1 + $0x28] sm:$0xff]
  %v119 = vld [vmem:[%s1 + $0x30] sm:$0xff]
  %v120 = vld [vmem:[%s1 + $0x38] sm:$0xff]
  %v121 = vld [vmem:[%s1 + $0x40] sm:$0xff]
  %v122 = vld [vmem:[%s1 + $0x48] sm:$0xff]
  %v123 = vld [vmem:[%s1 + $0x50] sm:$0x1]
  %v124 = vlaneseq
  %v125 = vshrl.u32 %v124, 7
  %v126 = vsub.s32 0, %v125
  %v127 = vrot.slane %v123, %v126
  %vm128 = vcmask 523264
  %v130 = vsel %vm128, %v111, 0
  %v133 = vsel %vm128, %v112, 0
  %v136 = vsel %vm128, %v113, 0
  %v139 = vsel %vm128, %v114, 0
  %141 = vmatprep.subr.mxu0 0.0
  %142 = vmatpush1.msra.mxu0 %v115
  %143 = vmatprep.subr.mxu0 0.0
  %144 = vmatpush1.msra.mxu0 %v116
  %145 = vmatprep.subr.mxu0 0.0
  %146 = vmatpush1.msra.mxu0 %v117
  %147 = vmatprep.subr.mxu0 0.0
  %148 = vmatpush1.msra.mxu0 %v118
  %149 = vmatprep.subr.mxu0 0.0
  %150 = vmatpush1.msra.mxu0 %v119
  %151 = vmatprep.subr.mxu0 0.0
  %152 = vmatpush1.msra.mxu0 %v120
  %153 = vmatprep.subr.mxu0 0.0
  %154 = vmatpush1.msra.mxu0 %v121
  %155 = vmatprep.subr.mxu0 0.0
  %156 = vmatpush1.msra.mxu0 %v122
  %157 = vmatprep.subr.mxu0 0.0
  %158 = vmatpush1.msra.mxu0 0.0
  %159 = vmatprep.subr.mxu0 0.0
  %160 = vmatpush1.msra.mxu0 0.0
  %161 = vmatprep.subr.mxu0 0.0
  %162 = vmatpush1.msra.mxu0 0.0
  %163 = vmatprep.subr.mxu0 0.0
  %164 = vmatpush1.msra.mxu0 0.0
  %165 = vmatprep.subr.mxu0 0.0
  %166 = vmatpush1.msra.mxu0 0.0
  %167 = vmatprep.subr.mxu0 0.0
  %168 = vmatpush1.msra.mxu0 0.0
  %169 = vmatprep.subr.mxu0 0.0
  %170 = vmatpush1.msra.mxu0 0.0
  %171 = vmatprep.subr.mxu0 0.0
  %172 = vmatpush1.msra.mxu0 0.0
  %173 = vmatprep.subr.mxu0 0.0
  %174 = vmatpush1.msra.mxu0 0.0
  %175 = vmatprep.subr.mxu0 0.0
  %176 = vmatpush1.msra.mxu0 0.0
  %177 = vmatprep.subr.mxu0 0.0
  %178 = vmatpush1.msra.mxu0 0.0
  %179 = vmatprep.subr.mxu0 0.0
  %180 = vmatpush1.msra.mxu0 0.0
  %181 = vmatprep.subr.mxu0 0.0
  %182 = vmatpush1.msra.mxu0 0.0
  %183 = vmatprep.subr.mxu0 0.0
  %184 = vmatpush1.msra.mxu0 0.0
  %185 = vmatprep.subr.mxu0 0.0
  %186 = vmatpush1.msra.mxu0 0.0
  %187 = vmatprep.subr.mxu0 0.0
  %188 = vmatpush1.msra.mxu0 0.0
  %189 = vmatprep.subr.mxu0 0.0
  %190 = vmatpush1.msra.mxu0 0.0
  %191 = vmatprep.subr.mxu0 0.0
  %192 = vmatpush1.msra.mxu0 0.0
  %193 = vmatprep.subr.mxu0 0.0
  %194 = vmatpush1.msra.mxu0 0.0
  %195 = vmatprep.subr.mxu0 0.0
  %196 = vmatpush1.msra.mxu0 0.0
  %197 = vmatprep.subr.mxu0 0.0
  %198 = vmatpush1.msra.mxu0 0.0
  %199 = vmatprep.subr.mxu0 0.0
  %200 = vmatpush1.msra.mxu0 0.0
  %201 = vmatprep.subr.mxu0 0.0
  %202 = vmatpush1.msra.mxu0 0.0
  %203 = vmatprep.subr.mxu0 0.0
  %204 = vmatpush1.msra.mxu0 0.0
  %205 = vmatprep.mubr.f32.mxu0 0.0
  %206 = vmatmul.mubr.f32.gmra.mrb[0].mxu0 %v130
  %v207 = vpop.f32.mrb[0].mxu0
  %v208 = vadd.f32 %v127, %v207
  %v209 = vpop.f32.mrb[0].mxu0
  %210 = vmatprep.mubr.f32.mxu0 0.0
  %211 = vmatmul.mubr.f32.gmra.mrb[0].mxu0 %v133
  %v212 = vpop.f32.mrb[0].mxu0
  %v213 = vadd.f32 %v127, %v212
  %v214 = vpop.f32.mrb[0].mxu0
  %215 = vmatprep.mubr.f32.mxu0 0.0
  %216 = vmatmul.mubr.f32.gmra.mrb[0].mxu0 %v136
  %v217 = vpop.f32.mrb[0].mxu0
  %v218 = vadd.f32 %v127, %v217
  %v219 = vpop.f32.mrb[0].mxu0
  %220 = vmatprep.mubr.f32.mxu0 0.0
  %221 = vmatmul.mubr.f32.gmra.mrb[0].mxu0 %v139
  %v222 = vpop.f32.mrb[0].mxu0
  %v223 = vadd.f32 %v127, %v222
  %v224 = vpop.f32.mrb[0].mxu0
  %225 = vdwg.mxu0
  %v226 = vmax.f32 %v208, 0.0
  %v227 = vmax.f32 %v213, 0.0
  %v228 = vmax.f32 %v218, 0.0
  %v229 = vmax.f32 %v223, 0.0
  %v230 = vld [vmem:[%s0 + $0x20] sm:$0xff]
  %v231 = vld [vmem:[%s0 + $0x28] sm:$0xff]
  %v232 = vld [vmem:[%s1 + $0x58] sm:$0x1]
  %234 = vset.pattern.permute.xlu0 0
  %235 = vperm.xlu0 %234, %v230
  %v236 = vpop.permute.xlu0 %235
  %239 = vset.pattern.permute.xlu0 0
  %240 = vperm.xlu0 %239, %v231
  %v241 = vpop.permute.xlu0 %240
  %v243 = vlaneseq
  %v244 = vshrl.u32 %v243, 7
  %v245 = vsub.s32 0, %v244
  %v246 = vrot.slane %v232, %v245
  %v247 = vmul.f32 %v236, %v246
  %v248 = vmul.f32 %v241, %v246
  %v249 = vld [vmem:[%s1 + $0x59] sm:$0x1]
  %250 = vset.pattern.permute.xlu0 1
  %251 = vperm.xlu0 %250, %v230
  %v252 = vpop.permute.xlu0 %251
  %254 = vset.pattern.permute.xlu0 1
  %255 = vperm.xlu0 %254, %v231
  %v256 = vpop.permute.xlu0 %255
  %v258 = vlaneseq
  %v259 = vshrl.u32 %v258, 7
  %v260 = vsub.s32 0, %v259
  %v261 = vrot.slane %v249, %v260
  %v262 = vmul.f32 %v252, %v261
  %v263 = vmul.f32 %v256, %v261
  %v264 = vadd.f32 %v247, %v262
  %v265 = vadd.f32 %v248, %v263
  %v266 = vld [vmem:[%s1 + $0x5a] sm:$0x1]
  %267 = vset.pattern.permute.xlu0 2
  %268 = vperm.xlu0 %267, %v230
  %v269 = vpop.permute.xlu0 %268
  %271 = vset.pattern.permute.xlu0 2
  %272 = vperm.xlu0 %271, %v231
  %v273 = vpop.permute.xlu0 %272
  %v275 = vlaneseq
  %v276 = vshrl.u32 %v275, 7
  %v277 = vsub.s32 0, %v276
  %v278 = vrot.slane %v266, %v277
  %v279 = vmul.f32 %v269, %v278
  %v280 = vmul.f32 %v273, %v278
  %v281 = vadd.f32 %v264, %v279
  %v282 = vadd.f32 %v265, %v280
  %v283 = vld [vmem:[%s1 + $0x60] sm:$0x1]
  %v284 = vlaneseq
  %v285 = vshrl.u32 %v284, 7
  %v286 = vsub.s32 0, %v285
  %v287 = vrot.slane %v283, %v286
  %v288 = vadd.f32 %v281, %v287
  %v289 = vadd.f32 %v282, %v287
  %v290 = vmax.f32 %v288, 0.0
  %v291 = vmax.f32 %v289, 0.0
  %v292 = vld [vmem:[%s1 + $0x68] sm:$0xff]
  %v293 = vld [vmem:[%s1 + $0x70] sm:$0xff]
  %v294 = vld [vmem:[%s1 + $0x78] sm:$0xff]
  %v295 = vld [vmem:[%s1 + $0x80] sm:$0xff]
  %v296 = vld [vmem:[%s1 + $0x88] sm:$0xff]
  %v297 = vld [vmem:[%s1 + $0x90] sm:$0xff]
  %v298 = vld [vmem:[%s1 + $0x98] sm:$0xff]
  %v299 = vld [vmem:[%s1 + $0xa0] sm:$0xff]
  %v300 = vld [vmem:[%s1 + $0xa8] sm:$0x1]
  %v301 = vlaneseq
  %v302 = vshrl.u32 %v301, 7
  %v303 = vsub.s32 0, %v302
  %v304 = vrot.slane %v300, %v303
  %v306 = vsel %vm128, %v290, 0
  %v309 = vsel %vm128, %v291, 0
  %311 = vmatprep.subr.mxu0 0.0
  %312 = vmatpush1.msra.mxu0 %v292
  %313 = vmatprep.subr.mxu0 0.0
  %314 = vmatpush1.msra.mxu0 %v293
  %315 = vmatprep.subr.mxu0 0.0
  %316 = vmatpush1.msra.mxu0 %v294
  %317 = vmatprep.subr.mxu0 0.0
  %318 = vmatpush1.msra.mxu0 %v295
  %319 = vmatprep.subr.mxu0 0.0
  %320 = vmatpush1.msra.mxu0 %v296
  %321 = vmatprep.subr.mxu0 0.0
  %322 = vmatpush1.msra.mxu0 %v297
  %323 = vmatprep.subr.mxu0 0.0
  %324 = vmatpush1.msra.mxu0 %v298
  %325 = vmatprep.subr.mxu0 0.0
  %326 = vmatpush1.msra.mxu0 %v299
  %327 = vmatprep.subr.mxu0 0.0
  %328 = vmatpush1.msra.mxu0 0.0
  %329 = vmatprep.subr.mxu0 0.0
  %330 = vmatpush1.msra.mxu0 0.0
  %331 = vmatprep.subr.mxu0 0.0
  %332 = vmatpush1.msra.mxu0 0.0
  %333 = vmatprep.subr.mxu0 0.0
  %334 = vmatpush1.msra.mxu0 0.0
  %335 = vmatprep.subr.mxu0 0.0
  %336 = vmatpush1.msra.mxu0 0.0
  %337 = vmatprep.subr.mxu0 0.0
  %338 = vmatpush1.msra.mxu0 0.0
  %339 = vmatprep.subr.mxu0 0.0
  %340 = vmatpush1.msra.mxu0 0.0
  %341 = vmatprep.subr.mxu0 0.0
  %342 = vmatpush1.msra.mxu0 0.0
  %343 = vmatprep.subr.mxu0 0.0
  %344 = vmatpush1.msra.mxu0 0.0
  %345 = vmatprep.subr.mxu0 0.0
  %346 = vmatpush1.msra.mxu0 0.0
  %347 = vmatprep.subr.mxu0 0.0
  %348 = vmatpush1.msra.mxu0 0.0
  %349 = vmatprep.subr.mxu0 0.0
  %350 = vmatpush1.msra.mxu0 0.0
  %351 = vmatprep.subr.mxu0 0.0
  %352 = vmatpush1.msra.mxu0 0.0
  %353 = vmatprep.subr.mxu0 0.0
  %354 = vmatpush1.msra.mxu0 0.0
  %355 = vmatprep.subr.mxu0 0.0
  %356 = vmatpush1.msra.mxu0 0.0
  %357 = vmatprep.subr.mxu0 0.0
  %358 = vmatpush1.msra.mxu0 0.0
  %359 = vmatprep.subr.mxu0 0.0
  %360 = vmatpush1.msra.mxu0 0.0
  %361 = vmatprep.subr.mxu0 0.0
  %362 = vmatpush1.msra.mxu0 0.0
  %363 = vmatprep.subr.mxu0 0.0
  %364 = vmatpush1.msra.mxu0 0.0
  %365 = vmatprep.subr.mxu0 0.0
  %366 = vmatpush1.msra.mxu0 0.0
  %367 = vmatprep.subr.mxu0 0.0
  %368 = vmatpush1.msra.mxu0 0.0
  %369 = vmatprep.subr.mxu0 0.0
  %370 = vmatpush1.msra.mxu0 0.0
  %371 = vmatprep.subr.mxu0 0.0
  %372 = vmatpush1.msra.mxu0 0.0
  %373 = vmatprep.subr.mxu0 0.0
  %374 = vmatpush1.msra.mxu0 0.0
  %375 = vmatprep.mubr.f32.mxu0 0.0
  %376 = vmatmul.mubr.f32.gmra.mrb[0].mxu0 %v306
  %v377 = vpop.f32.mrb[0].mxu0
  %v378 = vadd.f32 %v304, %v377
  %v379 = vpop.f32.mrb[0].mxu0
  %380 = vmatprep.mubr.f32.mxu0 0.0
  %381 = vmatmul.mubr.f32.gmra.mrb[0].mxu0 %v309
  %v382 = vpop.f32.mrb[0].mxu0
  %v383 = vadd.f32 %v304, %v382
  %v384 = vpop.f32.mrb[0].mxu0
  %385 = vdwg.mxu0
  %v386 = vmax.f32 %v378, 0.0
  %v387 = vmax.f32 %v383, 0.0
  %v388 = vld [vmem:[%s1 + $0xb0] sm:$0xff]
  %v389 = vld [vmem:[%s1 + $0xb8] sm:$0xff]
  %v390 = vld [vmem:[%s1 + $0xc0] sm:$0xff]
  %v391 = vld [vmem:[%s1 + $0xc8] sm:$0xff]
  %v392 = vld [vmem:[%s1 + $0xd0] sm:$0xff]
  %v393 = vld [vmem:[%s1 + $0xd8] sm:$0xff]
  %v394 = vld [vmem:[%s1 + $0xe0] sm:$0xff]
  %v395 = vld [vmem:[%s1 + $0xe8] sm:$0xff]
  %v396 = vld [vmem:[%s1 + $0xf0] sm:$0x1]
  %v397 = vlaneseq
  %v398 = vshrl.u32 %v397, 7
  %v399 = vsub.s32 0, %v398
  %v400 = vrot.slane %v396, %v399
  %v402 = vsel %vm128, %v386, 0
  %v405 = vsel %vm128, %v387, 0
  %407 = vmatprep.subr.mxu0 0.0
  %408 = vmatpush1.msra.mxu0 %v388
  %409 = vmatprep.subr.mxu0 0.0
  %410 = vmatpush1.msra.mxu0 %v389
  %411 = vmatprep.subr.mxu0 0.0
  %412 = vmatpush1.msra.mxu0 %v390
  %413 = vmatprep.subr.mxu0 0.0
  %414 = vmatpush1.msra.mxu0 %v391
  %415 = vmatprep.subr.mxu0 0.0
  %416 = vmatpush1.msra.mxu0 %v392
  %417 = vmatprep.subr.mxu0 0.0
  %418 = vmatpush1.msra.mxu0 %v393
  %419 = vmatprep.subr.mxu0 0.0
  %420 = vmatpush1.msra.mxu0 %v394
  %421 = vmatprep.subr.mxu0 0.0
  %422 = vmatpush1.msra.mxu0 %v395
  %423 = vmatprep.subr.mxu0 0.0
  %424 = vmatpush1.msra.mxu0 0.0
  %425 = vmatprep.subr.mxu0 0.0
  %426 = vmatpush1.msra.mxu0 0.0
  %427 = vmatprep.subr.mxu0 0.0
  %428 = vmatpush1.msra.mxu0 0.0
  %429 = vmatprep.subr.mxu0 0.0
  %430 = vmatpush1.msra.mxu0 0.0
  %431 = vmatprep.subr.mxu0 0.0
  %432 = vmatpush1.msra.mxu0 0.0
  %433 = vmatprep.subr.mxu0 0.0
  %434 = vmatpush1.msra.mxu0 0.0
  %435 = vmatprep.subr.mxu0 0.0
  %436 = vmatpush1.msra.mxu0 0.0
  %437 = vmatprep.subr.mxu0 0.0
  %438 = vmatpush1.msra.mxu0 0.0
  %439 = vmatprep.subr.mxu0 0.0
  %440 = vmatpush1.msra.mxu0 0.0
  %441 = vmatprep.subr.mxu0 0.0
  %442 = vmatpush1.msra.mxu0 0.0
  %443 = vmatprep.subr.mxu0 0.0
  %444 = vmatpush1.msra.mxu0 0.0
  %445 = vmatprep.subr.mxu0 0.0
  %446 = vmatpush1.msra.mxu0 0.0
  %447 = vmatprep.subr.mxu0 0.0
  %448 = vmatpush1.msra.mxu0 0.0
  %449 = vmatprep.subr.mxu0 0.0
  %450 = vmatpush1.msra.mxu0 0.0
  %451 = vmatprep.subr.mxu0 0.0
  %452 = vmatpush1.msra.mxu0 0.0
  %453 = vmatprep.subr.mxu0 0.0
  %454 = vmatpush1.msra.mxu0 0.0
  %455 = vmatprep.subr.mxu0 0.0
  %456 = vmatpush1.msra.mxu0 0.0
  %457 = vmatprep.subr.mxu0 0.0
  %458 = vmatpush1.msra.mxu0 0.0
  %459 = vmatprep.subr.mxu0 0.0
  %460 = vmatpush1.msra.mxu0 0.0
  %461 = vmatprep.subr.mxu0 0.0
  %462 = vmatpush1.msra.mxu0 0.0
  %463 = vmatprep.subr.mxu0 0.0
  %464 = vmatpush1.msra.mxu0 0.0
  %465 = vmatprep.subr.mxu0 0.0
  %466 = vmatpush1.msra.mxu0 0.0
  %467 = vmatprep.subr.mxu0 0.0
  %468 = vmatpush1.msra.mxu0 0.0
  %469 = vmatprep.subr.mxu0 0.0
  %470 = vmatpush1.msra.mxu0 0.0
  %471 = vmatprep.mubr.f32.mxu0 0.0
  %472 = vmatmul.mubr.f32.gmra.mrb[0].mxu0 %v402
  %v473 = vpop.f32.mrb[0].mxu0
  %v474 = vadd.f32 %v400, %v473
  %v475 = vpop.f32.mrb[0].mxu0
  %476 = vmatprep.mubr.f32.mxu0 0.0
  %477 = vmatmul.mubr.f32.gmra.mrb[0].mxu0 %v405
  %v478 = vpop.f32.mrb[0].mxu0
  %v479 = vadd.f32 %v400, %v478
  %v480 = vpop.f32.mrb[0].mxu0
  %481 = vdwg.mxu0
  %v482 = vrot.slane %v474, 4
  %v483 = vmax.f32 %v474, %v482
  %v484 = vrot.slane %v483, 2
  %v485 = vmax.f32 %v483, %v484
  %v486 = vrot.slane %v485, 1
  %v487 = vmax.f32 %v485, %v486
  %v488 = vld [vmem:[%s1 + $0x138] sm:$0xff]
  %v489 = vld [vmem:[%s1 + $0x140] sm:$0xff]
  %v490 = vld [vmem:[%s1 + $0x148] sm:$0xff]
  %v491 = vld [vmem:[%s1 + $0x150] sm:$0xff]
  %v492 = vld [vmem:[%s1 + $0x158] sm:$0xff]
  %v493 = vld [vmem:[%s1 + $0x160] sm:$0xff]
  %v494 = vld [vmem:[%s1 + $0x168] sm:$0xff]
  %v495 = vld [vmem:[%s1 + $0x170] sm:$0xff]
  %v496 = vld [vmem:[%s1 + $0x178] sm:$0xff]
  %v497 = vld [vmem:[%s1 + $0x180] sm:$0xff]
  %v498 = vld [vmem:[%s1 + $0x188] sm:$0xff]
  %v499 = vld [vmem:[%s1 + $0x190] sm:$0xff]
  %v500 = vld [vmem:[%s1 + $0x198] sm:$0xff]
  %v501 = vld [vmem:[%s1 + $0x1a0] sm:$0xff]
  %v502 = vld [vmem:[%s1 + $0x1a8] sm:$0xff]
  %v503 = vld [vmem:[%s1 + $0x1b0] sm:$0xff]
  %504 = vmatprep.subr.mxu0 0.0
  %505 = vmatpush1.msra.mxu0 %v488
  %506 = vmatprep.subr.mxu0 0.0
  %507 = vmatpush1.msra.mxu0 %v489
  %508 = vmatprep.subr.mxu0 0.0
  %509 = vmatpush1.msra.mxu0 %v490
  %510 = vmatprep.subr.mxu0 0.0
  %511 = vmatpush1.msra.mxu0 %v491
  %512 = vmatprep.subr.mxu0 0.0
  %513 = vmatpush1.msra.mxu0 %v492
  %514 = vmatprep.subr.mxu0 0.0
  %515 = vmatpush1.msra.mxu0 %v493
  %516 = vmatprep.subr.mxu0 0.0
  %517 = vmatpush1.msra.mxu0 %v494
  %518 = vmatprep.subr.mxu0 0.0
  %519 = vmatpush1.msra.mxu0 %v495
  %520 = vmatprep.subr.mxu0 0.0
  %521 = vmatpush1.msra.mxu0 %v496
  %522 = vmatprep.subr.mxu0 0.0
  %523 = vmatpush1.msra.mxu0 %v497
  %524 = vmatprep.subr.mxu0 0.0
  %525 = vmatpush1.msra.mxu0 %v498
  %526 = vmatprep.subr.mxu0 0.0
  %527 = vmatpush1.msra.mxu0 %v499
  %528 = vmatprep.subr.mxu0 0.0
  %529 = vmatpush1.msra.mxu0 %v500
  %530 = vmatprep.subr.mxu0 0.0
  %531 = vmatpush1.msra.mxu0 %v501
  %532 = vmatprep.subr.mxu0 0.0
  %533 = vmatpush1.msra.mxu0 %v502
  %534 = vmatprep.subr.mxu0 0.0
  %535 = vmatpush1.msra.mxu0 %v503
  %536 = vmatprep.subr.mxu0 0.0
  %537 = vmatpush1.msra.mxu0 0.0
  %538 = vmatprep.subr.mxu0 0.0
  %539 = vmatpush1.msra.mxu0 0.0
  %540 = vmatprep.subr.mxu0 0.0
  %541 = vmatpush1.msra.mxu0 0.0
  %542 = vmatprep.subr.mxu0 0.0
  %543 = vmatpush1.msra.mxu0 0.0
  %544 = vmatprep.subr.mxu0 0.0
  %545 = vmatpush1.msra.mxu0 0.0
  %546 = vmatprep.subr.mxu0 0.0
  %547 = vmatpush1.msra.mxu0 0.0
  %548 = vmatprep.subr.mxu0 0.0
  %549 = vmatpush1.msra.mxu0 0.0
  %550 = vmatprep.subr.mxu0 0.0
  %551 = vmatpush1.msra.mxu0 0.0
  %552 = vmatprep.subr.mxu0 0.0
  %553 = vmatpush1.msra.mxu0 0.0
  %554 = vmatprep.subr.mxu0 0.0
  %555 = vmatpush1.msra.mxu0 0.0
  %556 = vmatprep.subr.mxu0 0.0
  %557 = vmatpush1.msra.mxu0 0.0
  %558 = vmatprep.subr.mxu0 0.0
  %559 = vmatpush1.msra.mxu0 0.0
  %560 = vmatprep.subr.mxu0 0.0
  %561 = vmatpush1.msra.mxu0 0.0
  %562 = vmatprep.subr.mxu0 0.0
  %563 = vmatpush1.msra.mxu0 0.0
  %564 = vmatprep.subr.mxu0 0.0
  %565 = vmatpush1.msra.mxu0 0.0
  %566 = vmatprep.subr.mxu0 0.0
  %567 = vmatpush1.msra.mxu0 0.0
  %568 = vmatprep.mubr.f32.mxu0 0.0
  %569 = vmatmul.mubr.f32.gmra.mrb[0].mxu0 %v487
  %v570 = vpop.f32.mrb[0].mxu0
  %v571 = vadd.f32 0.0, %v570
  %v572 = vpop.f32.mrb[0].mxu0
  %573 = vdwg.mxu0
  %v574 = vlaneseq
  %v575 = vshrl.u32 %v574, 7
  %v576 = vsub.s32 0, %v575
  %v577 = vrot.slane %v571, %v576
  %v578 = vrot.slane %v479, 4
  %v579 = vmax.f32 %v479, %v578
  %v580 = vrot.slane %v579, 2
  %v581 = vmax.f32 %v579, %v580
  %v582 = vrot.slane %v581, 1
  %v583 = vmax.f32 %v581, %v582
  %584 = vmatprep.subr.mxu0 0.0
  %585 = vmatpush1.msra.mxu0 %v488
  %586 = vmatprep.subr.mxu0 0.0
  %587 = vmatpush1.msra.mxu0 %v489
  %588 = vmatprep.subr.mxu0 0.0
  %589 = vmatpush1.msra.mxu0 %v490
  %590 = vmatprep.subr.mxu0 0.0
  %591 = vmatpush1.msra.mxu0 %v491
  %592 = vmatprep.subr.mxu0 0.0
  %593 = vmatpush1.msra.mxu0 %v492
  %594 = vmatprep.subr.mxu0 0.0
  %595 = vmatpush1.msra.mxu0 %v493
  %596 = vmatprep.subr.mxu0 0.0
  %597 = vmatpush1.msra.mxu0 %v494
  %598 = vmatprep.subr.mxu0 0.0
  %599 = vmatpush1.msra.mxu0 %v495
  %600 = vmatprep.subr.mxu0 0.0
  %601 = vmatpush1.msra.mxu0 %v496
  %602 = vmatprep.subr.mxu0 0.0
  %603 = vmatpush1.msra.mxu0 %v497
  %604 = vmatprep.subr.mxu0 0.0
  %605 = vmatpush1.msra.mxu0 %v498
  %606 = vmatprep.subr.mxu0 0.0
  %607 = vmatpush1.msra.mxu0 %v499
  %608 = vmatprep.subr.mxu0 0.0
  %609 = vmatpush1.msra.mxu0 %v500
  %610 = vmatprep.subr.mxu0 0.0
  %611 = vmatpush1.msra.mxu0 %v501
  %612 = vmatprep.subr.mxu0 0.0
  %613 = vmatpush1.msra.mxu0 %v502
  %614 = vmatprep.subr.mxu0 0.0
  %615 = vmatpush1.msra.mxu0 %v503
  %616 = vmatprep.subr.mxu0 0.0
  %617 = vmatpush1.msra.mxu0 0.0
  %618 = vmatprep.subr.mxu0 0.0
  %619 = vmatpush1.msra.mxu0 0.0
  %620 = vmatprep.subr.mxu0 0.0
  %621 = vmatpush1.msra.mxu0 0.0
  %622 = vmatprep.subr.mxu0 0.0
  %623 = vmatpush1.msra.mxu0 0.0
  %624 = vmatprep.subr.mxu0 0.0
  %625 = vmatpush1.msra.mxu0 0.0
  %626 = vmatprep.subr.mxu0 0.0
  %627 = vmatpush1.msra.mxu0 0.0
  %628 = vmatprep.subr.mxu0 0.0
  %629 = vmatpush1.msra.mxu0 0.0
  %630 = vmatprep.subr.mxu0 0.0
  %631 = vmatpush1.msra.mxu0 0.0
  %632 = vmatprep.subr.mxu0 0.0
  %633 = vmatpush1.msra.mxu0 0.0
  %634 = vmatprep.subr.mxu0 0.0
  %635 = vmatpush1.msra.mxu0 0.0
  %636 = vmatprep.subr.mxu0 0.0
  %637 = vmatpush1.msra.mxu0 0.0
  %638 = vmatprep.subr.mxu0 0.0
  %639 = vmatpush1.msra.mxu0 0.0
  %640 = vmatprep.subr.mxu0 0.0
  %641 = vmatpush1.msra.mxu0 0.0
  %642 = vmatprep.subr.mxu0 0.0
  %643 = vmatpush1.msra.mxu0 0.0
  %644 = vmatprep.subr.mxu0 0.0
  %645 = vmatpush1.msra.mxu0 0.0
  %646 = vmatprep.subr.mxu0 0.0
  %647 = vmatpush1.msra.mxu0 0.0
  %648 = vmatprep.mubr.f32.mxu0 0.0
  %649 = vmatmul.mubr.f32.gmra.mrb[0].mxu0 %v583
  %v650 = vpop.f32.mrb[0].mxu0
  %v651 = vadd.f32 0.0, %v650
  %v652 = vpop.f32.mrb[0].mxu0
  %653 = vdwg.mxu0
  %v654 = vlaneseq
  %v655 = vshrl.u32 %v654, 7
  %v656 = vsub.s32 0, %v655
  %v657 = vrot.slane %v651, %v656
  %v658 = vld [vmem:[%s1 + $0xf8] sm:$0xff]
  %v659 = vld [vmem:[%s1 + $0x100] sm:$0xff]
  %v660 = vld [vmem:[%s1 + $0x108] sm:$0xff]
  %v661 = vld [vmem:[%s1 + $0x110] sm:$0xff]
  %v662 = vld [vmem:[%s1 + $0x118] sm:$0xff]
  %v663 = vld [vmem:[%s1 + $0x120] sm:$0xff]
  %v664 = vld [vmem:[%s1 + $0x128] sm:$0xff]
  %v665 = vld [vmem:[%s1 + $0x130] sm:$0xff]
  %v667 = vsel %vm128, %v226, 0
  %v670 = vsel %vm128, %v227, 0
  %v673 = vsel %vm128, %v228, 0
  %v676 = vsel %vm128, %v229, 0
  %678 = vmatprep.subr.mxu0 0.0
  %679 = vmatpush1.msra.mxu0 %v658
  %680 = vmatprep.subr.mxu0 0.0
  %681 = vmatpush1.msra.mxu0 %v659
  %682 = vmatprep.subr.mxu0 0.0
  %683 = vmatpush1.msra.mxu0 %v660
  %684 = vmatprep.subr.mxu0 0.0
  %685 = vmatpush1.msra.mxu0 %v661
  %686 = vmatprep.subr.mxu0 0.0
  %687 = vmatpush1.msra.mxu0 %v662
  %688 = vmatprep.subr.mxu0 0.0
  %689 = vmatpush1.msra.mxu0 %v663
  %690 = vmatprep.subr.mxu0 0.0
  %691 = vmatpush1.msra.mxu0 %v664
  %692 = vmatprep.subr.mxu0 0.0
  %693 = vmatpush1.msra.mxu0 %v665
  %694 = vmatprep.subr.mxu0 0.0
  %695 = vmatpush1.msra.mxu0 0.0
  %696 = vmatprep.subr.mxu0 0.0
  %697 = vmatpush1.msra.mxu0 0.0
  %698 = vmatprep.subr.mxu0 0.0
  %699 = vmatpush1.msra.mxu0 0.0
  %700 = vmatprep.subr.mxu0 0.0
  %701 = vmatpush1.msra.mxu0 0.0
  %702 = vmatprep.subr.mxu0 0.0
  %703 = vmatpush1.msra.mxu0 0.0
  %704 = vmatprep.subr.mxu0 0.0
  %705 = vmatpush1.msra.mxu0 0.0
  %706 = vmatprep.subr.mxu0 0.0
  %707 = vmatpush1.msra.mxu0 0.0
  %708 = vmatprep.subr.mxu0 0.0
  %709 = vmatpush1.msra.mxu0 0.0
  %710 = vmatprep.subr.mxu0 0.0
  %711 = vmatpush1.msra.mxu0 0.0
  %712 = vmatprep.subr.mxu0 0.0
  %713 = vmatpush1.msra.mxu0 0.0
  %714 = vmatprep.subr.mxu0 0.0
  %715 = vmatpush1.msra.mxu0 0.0
  %716 = vmatprep.subr.mxu0 0.0
  %717 = vmatpush1.msra.mxu0 0.0
  %718 = vmatprep.subr.mxu0 0.0
  %719 = vmatpush1.msra.mxu0 0.0
  %720 = vmatprep.subr.mxu0 0.0
  %721 = vmatpush1.msra.mxu0 0.0
  %722 = vmatprep.subr.mxu0 0.0
  %723 = vmatpush1.msra.mxu0 0.0
  %724 = vmatprep.subr.mxu0 0.0
  %725 = vmatpush1.msra.mxu0 0.0
  %726 = vmatprep.subr.mxu0 0.0
  %727 = vmatpush1.msra.mxu0 0.0
  %728 = vmatprep.subr.mxu0 0.0
  %729 = vmatpush1.msra.mxu0 0.0
  %730 = vmatprep.subr.mxu0 0.0
  %731 = vmatpush1.msra.mxu0 0.0
  %732 = vmatprep.subr.mxu0 0.0
  %733 = vmatpush1.msra.mxu0 0.0
  %734 = vmatprep.subr.mxu0 0.0
  %735 = vmatpush1.msra.mxu0 0.0
  %736 = vmatprep.subr.mxu0 0.0
  %737 = vmatpush1.msra.mxu0 0.0
  %738 = vmatprep.subr.mxu0 0.0
  %739 = vmatpush1.msra.mxu0 0.0
  %740 = vmatprep.subr.mxu0 0.0
  %741 = vmatpush1.msra.mxu0 0.0
  %742 = vmatprep.mubr.f32.mxu0 0.0
  %743 = vmatmul.mubr.f32.gmra.mrb[0].mxu0 %v667
  %v744 = vpop.f32.mrb[0].mxu0
  %v745 = vadd.f32 %v577, %v744
  %v746 = vpop.f32.mrb[0].mxu0
  %747 = vmatprep.mubr.f32.mxu0 0.0
  %748 = vmatmul.mubr.f32.gmra.mrb[0].mxu0 %v670
  %v749 = vpop.f32.mrb[0].mxu0
  %v750 = vadd.f32 %v577, %v749
  %v751 = vpop.f32.mrb[0].mxu0
  %752 = vmatprep.mubr.f32.mxu0 0.0
  %753 = vmatmul.mubr.f32.gmra.mrb[0].mxu0 %v673
  %v754 = vpop.f32.mrb[0].mxu0
  %v755 = vadd.f32 %v657, %v754
  %v756 = vpop.f32.mrb[0].mxu0
  %757 = vmatprep.mubr.f32.mxu0 0.0
  %758 = vmatmul.mubr.f32.gmra.mrb[0].mxu0 %v676
  %v759 = vpop.f32.mrb[0].mxu0
  %v760 = vadd.f32 %v657, %v759
  %v761 = vpop.f32.mrb[0].mxu0
  %762 = vdwg.mxu0
  %v763 = vld [vmem:[%s1 + $0x1b8] sm:$0x1]
  %v764 = vlaneseq
  %v765 = vshrl.u32 %v764, 7
  %v766 = vsub.s32 0, %v765
  %v767 = vrot.slane %v763, %v766
  %v768 = vadd.f32 %v745, %v767
  %v769 = vadd.f32 %v750, %v767
  %v770 = vadd.f32 %v755, %v767
  %v771 = vadd.f32 %v760, %v767
  %v772 = vmax.f32 %v768, 0.0
  %v773 = vmax.f32 %v769, 0.0
  %v774 = vmax.f32 %v770, 0.0
  %v775 = vmax.f32 %v771, 0.0
  %v776 = vld [vmem:[%s1 + $0x1c0] sm:$0xff]
  %v777 = vld [vmem:[%s1 + $0x1c8] sm:$0xff]
  %v778 = vld [vmem:[%s1 + $0x1d0] sm:$0xff]
  %v779 = vld [vmem:[%s1 + $0x1d8] sm:$0xff]
  %v780 = vld [vmem:[%s1 + $0x1e0] sm:$0xff]
  %v781 = vld [vmem:[%s1 + $0x1e8] sm:$0xff]
  %v782 = vld [vmem:[%s1 + $0x1f0] sm:$0xff]
  %v783 = vld [vmem:[%s1 + $0x1f8] sm:$0xff]
  %v784 = vld [vmem:[%s1 + $0x200] sm:$0xff]
  %v785 = vld [vmem:[%s1 + $0x208] sm:$0xff]
  %v786 = vld [vmem:[%s1 + $0x210] sm:$0xff]
  %v787 = vld [vmem:[%s1 + $0x218] sm:$0xff]
  %v788 = vld [vmem:[%s1 + $0x220] sm:$0xff]
  %v789 = vld [vmem:[%s1 + $0x228] sm:$0xff]
  %v790 = vld [vmem:[%s1 + $0x230] sm:$0xff]
  %v791 = vld [vmem:[%s1 + $0x238] sm:$0xff]
  %v792 = vld [vmem:[%s1 + $0x240] sm:$0x1]
  %v793 = vlaneseq
  %v794 = vshrl.u32 %v793, 7
  %v795 = vsub.s32 0, %v794
  %v796 = vrot.slane %v792, %v795
  %797 = vmatprep.subr.mxu0 0.0
  %798 = vmatpush1.msra.mxu0 %v776
  %799 = vmatprep.subr.mxu0 0.0
  %800 = vmatpush1.msra.mxu0 %v777
  %801 = vmatprep.subr.mxu0 0.0
  %802 = vmatpush1.msra.mxu0 %v778
  %803 = vmatprep.subr.mxu0 0.0
  %804 = vmatpush1.msra.mxu0 %v779
  %805 = vmatprep.subr.mxu0 0.0
  %806 = vmatpush1.msra.mxu0 %v780
  %807 = vmatprep.subr.mxu0 0.0
  %808 = vmatpush1.msra.mxu0 %v781
  %809 = vmatprep.subr.mxu0 0.0
  %810 = vmatpush1.msra.mxu0 %v782
  %811 = vmatprep.subr.mxu0 0.0
  %812 = vmatpush1.msra.mxu0 %v783
  %813 = vmatprep.subr.mxu0 0.0
  %814 = vmatpush1.msra.mxu0 %v784
  %815 = vmatprep.subr.mxu0 0.0
  %816 = vmatpush1.msra.mxu0 %v785
  %817 = vmatprep.subr.mxu0 0.0
  %818 = vmatpush1.msra.mxu0 %v786
  %819 = vmatprep.subr.mxu0 0.0
  %820 = vmatpush1.msra.mxu0 %v787
  %821 = vmatprep.subr.mxu0 0.0
  %822 = vmatpush1.msra.mxu0 %v788
  %823 = vmatprep.subr.mxu0 0.0
  %824 = vmatpush1.msra.mxu0 %v789
  %825 = vmatprep.subr.mxu0 0.0
  %826 = vmatpush1.msra.mxu0 %v790
  %827 = vmatprep.subr.mxu0 0.0
  %828 = vmatpush1.msra.mxu0 %v791
  %829 = vmatprep.subr.mxu0 0.0
  %830 = vmatpush1.msra.mxu0 0.0
  %831 = vmatprep.subr.mxu0 0.0
  %832 = vmatpush1.msra.mxu0 0.0
  %833 = vmatprep.subr.mxu0 0.0
  %834 = vmatpush1.msra.mxu0 0.0
  %835 = vmatprep.subr.mxu0 0.0
  %836 = vmatpush1.msra.mxu0 0.0
  %837 = vmatprep.subr.mxu0 0.0
  %838 = vmatpush1.msra.mxu0 0.0
  %839 = vmatprep.subr.mxu0 0.0
  %840 = vmatpush1.msra.mxu0 0.0
  %841 = vmatprep.subr.mxu0 0.0
  %842 = vmatpush1.msra.mxu0 0.0
  %843 = vmatprep.subr.mxu0 0.0
  %844 = vmatpush1.msra.mxu0 0.0
  %845 = vmatprep.subr.mxu0 0.0
  %846 = vmatpush1.msra.mxu0 0.0
  %847 = vmatprep.subr.mxu0 0.0
  %848 = vmatpush1.msra.mxu0 0.0
  %849 = vmatprep.subr.mxu0 0.0
  %850 = vmatpush1.msra.mxu0 0.0
  %851 = vmatprep.subr.mxu0 0.0
  %852 = vmatpush1.msra.mxu0 0.0
  %853 = vmatprep.subr.mxu0 0.0
  %854 = vmatpush1.msra.mxu0 0.0
  %855 = vmatprep.subr.mxu0 0.0
  %856 = vmatpush1.msra.mxu0 0.0
  %857 = vmatprep.subr.mxu0 0.0
  %858 = vmatpush1.msra.mxu0 0.0
  %859 = vmatprep.subr.mxu0 0.0
  %860 = vmatpush1.msra.mxu0 0.0
  %861 = vmatprep.mubr.f32.mxu0 0.0
  %862 = vmatmul.mubr.f32.gmra.mrb[0].mxu0 %v772
  %v863 = vpop.f32.mrb[0].mxu0
  %v864 = vadd.f32 %v796, %v863
  %v865 = vpop.f32.mrb[0].mxu0
  %866 = vmatprep.mubr.f32.mxu0 0.0
  %867 = vmatmul.mubr.f32.gmra.mrb[0].mxu0 %v773
  %v868 = vpop.f32.mrb[0].mxu0
  %v869 = vadd.f32 %v796, %v868
  %v870 = vpop.f32.mrb[0].mxu0
  %871 = vmatprep.mubr.f32.mxu0 0.0
  %872 = vmatmul.mubr.f32.gmra.mrb[0].mxu0 %v774
  %v873 = vpop.f32.mrb[0].mxu0
  %v874 = vadd.f32 %v796, %v873
  %v875 = vpop.f32.mrb[0].mxu0
  %876 = vmatprep.mubr.f32.mxu0 0.0
  %877 = vmatmul.mubr.f32.gmra.mrb[0].mxu0 %v775
  %v878 = vpop.f32.mrb[0].mxu0
  %v879 = vadd.f32 %v796, %v878
  %v880 = vpop.f32.mrb[0].mxu0
  %881 = vdwg.mxu0
  %v882 = vmax.f32 %v864, 0.0
  %v883 = vmax.f32 %v869, 0.0
  %v884 = vmax.f32 %v874, 0.0
  %v885 = vmax.f32 %v879, 0.0
  %v886 = vld [vmem:[%s1 + $0x248] sm:$0xff]
  %v887 = vld [vmem:[%s1 + $0x250] sm:$0xff]
  %v888 = vld [vmem:[%s1 + $0x258] sm:$0xff]
  %v889 = vld [vmem:[%s1 + $0x260] sm:$0xff]
  %v890 = vld [vmem:[%s1 + $0x268] sm:$0xff]
  %v891 = vld [vmem:[%s1 + $0x270] sm:$0xff]
  %v892 = vld [vmem:[%s1 + $0x278] sm:$0xff]
  %v893 = vld [vmem:[%s1 + $0x280] sm:$0xff]
  %v894 = vld [vmem:[%s1 + $0x288] sm:$0x1]
  %v895 = vlaneseq
  %v896 = vshrl.u32 %v895, 7
  %v897 = vsub.s32 0, %v896
  %v898 = vrot.slane %v894, %v897
  %v900 = vsel %vm128, %v882, 0
  %v903 = vsel %vm128, %v883, 0
  %v906 = vsel %vm128, %v884, 0
  %v909 = vsel %vm128, %v885, 0
  %911 = vmatprep.subr.mxu0 0.0
  %912 = vmatpush1.msra.mxu0 %v886
  %913 = vmatprep.subr.mxu0 0.0
  %914 = vmatpush1.msra.mxu0 %v887
  %915 = vmatprep.subr.mxu0 0.0
  %916 = vmatpush1.msra.mxu0 %v888
  %917 = vmatprep.subr.mxu0 0.0
  %918 = vmatpush1.msra.mxu0 %v889
  %919 = vmatprep.subr.mxu0 0.0
  %920 = vmatpush1.msra.mxu0 %v890
  %921 = vmatprep.subr.mxu0 0.0
  %922 = vmatpush1.msra.mxu0 %v891
  %923 = vmatprep.subr.mxu0 0.0
  %924 = vmatpush1.msra.mxu0 %v892
  %925 = vmatprep.subr.mxu0 0.0
  %926 = vmatpush1.msra.mxu0 %v893
  %927 = vmatprep.subr.mxu0 0.0
  %928 = vmatpush1.msra.mxu0 0.0
  %929 = vmatprep.subr.mxu0 0.0
  %930 = vmatpush1.msra.mxu0 0.0
  %931 = vmatprep.subr.mxu0 0.0
  %932 = vmatpush1.msra.mxu0 0.0
  %933 = vmatprep.subr.mxu0 0.0
  %934 = vmatpush1.msra.mxu0 0.0
  %935 = vmatprep.subr.mxu0 0.0
  %936 = vmatpush1.msra.mxu0 0.0
  %937 = vmatprep.subr.mxu0 0.0
  %938 = vmatpush1.msra.mxu0 0.0
  %939 = vmatprep.subr.mxu0 0.0
  %940 = vmatpush1.msra.mxu0 0.0
  %941 = vmatprep.subr.mxu0 0.0
  %942 = vmatpush1.msra.mxu0 0.0
  %943 = vmatprep.subr.mxu0 0.0
  %944 = vmatpush1.msra.mxu0 0.0
  %945 = vmatprep.subr.mxu0 0.0
  %946 = vmatpush1.msra.mxu0 0.0
  %947 = vmatprep.subr.mxu0 0.0
  %948 = vmatpush1.msra.mxu0 0.0
  %949 = vmatprep.subr.mxu0 0.0
  %950 = vmatpush1.msra.mxu0 0.0
  %951 = vmatprep.subr.mxu0 0.0
  %952 = vmatpush1.msra.mxu0 0.0
  %953 = vmatprep.subr.mxu0 0.0
  %954 = vmatpush1.msra.mxu0 0.0
  %955 = vmatprep.subr.mxu0 0.0
  %956 = vmatpush1.msra.mxu0 0.0
  %957 = vmatprep.subr.mxu0 0.0
  %958 = vmatpush1.msra.mxu0 0.0
  %959 = vmatprep.subr.mxu0 0.0
  %960 = vmatpush1.msra.mxu0 0.0
  %961 = vmatprep.subr.mxu0 0.0
  %962 = vmatpush1.msra.mxu0 0.0
  %963 = vmatprep.subr.mxu0 0.0
  %964 = vmatpush1.msra.mxu0 0.0
  %965 = vmatprep.subr.mxu0 0.0
  %966 = vmatpush1.msra.mxu0 0.0
  %967 = vmatprep.subr.mxu0 0.0
  %968 = vmatpush1.msra.mxu0 0.0
  %969 = vmatprep.subr.mxu0 0.0
  %970 = vmatpush1.msra.mxu0 0.0
  %971 = vmatprep.subr.mxu0 0.0
  %972 = vmatpush1.msra.mxu0 0.0
  %973 = vmatprep.subr.mxu0 0.0
  %974 = vmatpush1.msra.mxu0 0.0
  %975 = vmatprep.mubr.f32.mxu0 0.0
  %976 = vmatmul.mubr.f32.gmra.mrb[0].mxu0 %v900
  %v977 = vpop.f32.mrb[0].mxu0
  %v978 = vadd.f32 %v898, %v977
  %v979 = vpop.f32.mrb[0].mxu0
  %980 = vmatprep.mubr.f32.mxu0 0.0
  %981 = vmatmul.mubr.f32.gmra.mrb[0].mxu0 %v903
  %v982 = vpop.f32.mrb[0].mxu0
  %v983 = vadd.f32 %v898, %v982
  %v984 = vpop.f32.mrb[0].mxu0
  %985 = vmatprep.mubr.f32.mxu0 0.0
  %986 = vmatmul.mubr.f32.gmra.mrb[0].mxu0 %v906
  %v987 = vpop.f32.mrb[0].mxu0
  %v988 = vadd.f32 %v898, %v987
  %v989 = vpop.f32.mrb[0].mxu0
  %990 = vmatprep.mubr.f32.mxu0 0.0
  %991 = vmatmul.mubr.f32.gmra.mrb[0].mxu0 %v909
  %v992 = vpop.f32.mrb[0].mxu0
  %v993 = vadd.f32 %v898, %v992
  %v994 = vpop.f32.mrb[0].mxu0
  %995 = vdwg.mxu0
  %v996 = vmax.f32 %v978, 0.0
  %v997 = vmax.f32 %v983, 0.0
  %v998 = vmax.f32 %v988, 0.0
  %v999 = vmax.f32 %v993, 0.0
  %v1000 = vld [vmem:[%s1 + $0x290] sm:$0x1]
  %v1001 = vlaneseq
  %v1002 = vshrl.u32 %v1001, 7
  %v1003 = vsub.s32 0, %v1002
  %v1004 = vrot.slane %v1000, %v1003
  %v1005 = vmul.f32 %v996, %v1004
  %v1006 = vmul.f32 %v997, %v1004
  %v1007 = vmul.f32 %v998, %v1004
  %v1008 = vmul.f32 %v999, %v1004
  %vm1009 = vcmask 261120
  %v1010 = vsel %vm1009, %v1005, 0.0
  %1011 = vadd.xlane.f32.xlu0 %v1010
  %v1012 = vpop.xlane.xlu0 %1011
  %v1013 = vsel %vm1009, %v1006, 0.0
  %1014 = vadd.xlane.f32.xlu0 %v1013
  %v1015 = vpop.xlane.xlu0 %1014
  %v1016 = vsel %vm1009, %v1007, 0.0
  %1017 = vadd.xlane.f32.xlu0 %v1016
  %v1018 = vpop.xlane.xlu0 %1017
  %v1019 = vsel %vm1009, %v1008, 0.0
  %1020 = vadd.xlane.f32.xlu0 %v1019
  %v1021 = vpop.xlane.xlu0 %1020
  %v1022 = vld [vmem:[%s1 + $0x298] sm:$0x1]
  %v1023 = vlaneseq
  %v1024 = vshrl.u32 %v1023, 7
  %v1025 = vsub.s32 0, %v1024
  %v1026 = vrot.slane %v1022, %v1025
  %v1027 = vadd.f32 %v1012, %v1026
  %v1028 = vadd.f32 %v1015, %v1026
  %v1029 = vadd.f32 %v1018, %v1026
  %v1030 = vadd.f32 %v1021, %v1026
  %1031 = vst [vmem:[%s2 + $0x20] sm:$0xff] 0.0
  %v1032 = vlaneseq
  %v1033 = vand.u32 %v1032, 127
  %vm1034 = vcmask 7168
  %v1035 = vsel %vm1034, %v1027, -inf
  %v1036 = vsel %vm1034, %v1028, -inf
  %v1037 = vmax.f32 %v1035, %v1036
  %v1038 = vrot.slane %v1037, 4
  %v1039 = vmax.f32 %v1037, %v1038
  %v1040 = vrot.slane %v1039, 2
  %v1041 = vmax.f32 %v1039, %v1040
  %v1042 = vrot.slane %v1041, 1
  %v1043 = vmax.f32 %v1041, %v1042
  %v1044 = vsub.f32 %v1027, %v1043
  %v1045 = vsub.f32 %v1028, %v1043
  %v1046 = vmul.f32 %v1044, 1.442695
  %v1047 = vpow.pop %v1046
  %v1048 = vmul.f32 %v1045, 1.442695
  %v1049 = vpow.pop %v1048
  %v1050 = vsel %vm1034, %v1047, 0.0
  %v1051 = vsel %vm1034, %v1049, 0.0
  %v1052 = vadd.f32 %v1050, %v1051
  %v1053 = vrot.slane %v1052, 4
  %v1054 = vadd.f32 %v1052, %v1053
  %v1055 = vrot.slane %v1054, 2
  %v1056 = vadd.f32 %v1054, %v1055
  %v1057 = vrot.slane %v1056, 1
  %v1058 = vadd.f32 %v1056, %v1057
  %v1059 = vrcp.pop %v1058
  %v1060 = vmul.f32 %v1047, %v1059
  %v1061 = vmul.f32 %v1049, %v1059
  %v1062 = vld [vmem:[%s0 + $0x30] sm:$0xff]
  %v1063 = vld [vmem:[%s0 + $0x38] sm:$0xff]
  %1065 = vset.pattern.permute.xlu0 0
  %1066 = vperm.xlu0 %1065, %v1060
  %v1067 = vpop.permute.xlu0 %1066
  %1070 = vset.pattern.permute.xlu0 0
  %1071 = vperm.xlu0 %1070, %v1061
  %v1072 = vpop.permute.xlu0 %1071
  %v1074 = vmul.f32 %v1067, %v1062
  %v1075 = vmul.f32 %v1072, %v1063
  %v1076 = vadd.f32 %v1074, %v1075
  %v1077 = vrot.slane %v1076, 4
  %v1078 = vadd.f32 %v1076, %v1077
  %v1079 = vrot.slane %v1078, 2
  %v1080 = vadd.f32 %v1078, %v1079
  %v1081 = vrot.slane %v1080, 1
  %v1082 = vadd.f32 %v1080, %v1081
  %v1083 = vsub.f32 0.0, %v1060
  %v1084 = vsub.f32 0.0, %v1061
  %v1085 = vmul.f32 %v1083, 1.442695
  %v1086 = vpow.pop %v1085
  %v1087 = vmul.f32 %v1084, 1.442695
  %v1088 = vpow.pop %v1087
  %v1089 = vadd.f32 %v1086, 1.0
  %v1090 = vadd.f32 %v1088, 1.0
  %v1091 = vrcp.pop %v1089
  %v1092 = vrcp.pop %v1090
  %vm1093 = vcmp.eq.s32.totalorder %v1033, 0
  %1095 = vset.pattern.permute.xlu0 0
  %1096 = vperm.xlu0 %1095, %v1027
  %v1097 = vpop.permute.xlu0 %1096
  %1100 = vset.pattern.permute.xlu0 0
  %1101 = vperm.xlu0 %1100, %v1028
  %v1102 = vpop.permute.xlu0 %1101
  %vm1104 = vcmp.eq.s32.totalorder %v1033, 1
  %1106 = vset.pattern.permute.xlu0 0
  %1107 = vperm.xlu0 %1106, %v1091
  %v1108 = vpop.permute.xlu0 %1107
  %1111 = vset.pattern.permute.xlu0 0
  %1112 = vperm.xlu0 %1111, %v1092
  %v1113 = vpop.permute.xlu0 %1112
  %v1115 = vsel %vm1104, %v1108, 0.0
  %v1116 = vsel %vm1104, %v1113, 0.0
  %v1117 = vsel %vm1093, %v1097, %v1115
  %v1118 = vsel %vm1093, %v1102, %v1116
  %1119 = vst [vmem:[%s2] sm:$0xff] %v1117
  %1120 = vst [vmem:[%s2 + $0x8] sm:$0xff] %v1118
  %1121 = vst [vmem:[%s2 + $0x20] sm:$0x1] %v1082
  %v1122 = vsel %vm1034, %v1029, -inf
  %v1123 = vsel %vm1034, %v1030, -inf
  %v1124 = vmax.f32 %v1122, %v1123
  %v1125 = vrot.slane %v1124, 4
  %v1126 = vmax.f32 %v1124, %v1125
  %v1127 = vrot.slane %v1126, 2
  %v1128 = vmax.f32 %v1126, %v1127
  %v1129 = vrot.slane %v1128, 1
  %v1130 = vmax.f32 %v1128, %v1129
  %v1131 = vsub.f32 %v1029, %v1130
  %v1132 = vsub.f32 %v1030, %v1130
  %v1133 = vmul.f32 %v1131, 1.442695
  %v1134 = vpow.pop %v1133
  %v1135 = vmul.f32 %v1132, 1.442695
  %v1136 = vpow.pop %v1135
  %v1137 = vsel %vm1034, %v1134, 0.0
  %v1138 = vsel %vm1034, %v1136, 0.0
  %v1139 = vadd.f32 %v1137, %v1138
  %v1140 = vrot.slane %v1139, 4
  %v1141 = vadd.f32 %v1139, %v1140
  %v1142 = vrot.slane %v1141, 2
  %v1143 = vadd.f32 %v1141, %v1142
  %v1144 = vrot.slane %v1143, 1
  %v1145 = vadd.f32 %v1143, %v1144
  %v1146 = vrcp.pop %v1145
  %v1147 = vmul.f32 %v1134, %v1146
  %v1148 = vmul.f32 %v1136, %v1146
  %v1149 = vld [vmem:[%s0 + $0x40] sm:$0xff]
  %v1150 = vld [vmem:[%s0 + $0x48] sm:$0xff]
  %1152 = vset.pattern.permute.xlu0 0
  %1153 = vperm.xlu0 %1152, %v1147
  %v1154 = vpop.permute.xlu0 %1153
  %1157 = vset.pattern.permute.xlu0 0
  %1158 = vperm.xlu0 %1157, %v1148
  %v1159 = vpop.permute.xlu0 %1158
  %v1161 = vmul.f32 %v1154, %v1149
  %v1162 = vmul.f32 %v1159, %v1150
  %v1163 = vadd.f32 %v1161, %v1162
  %v1164 = vrot.slane %v1163, 4
  %v1165 = vadd.f32 %v1163, %v1164
  %v1166 = vrot.slane %v1165, 2
  %v1167 = vadd.f32 %v1165, %v1166
  %v1168 = vrot.slane %v1167, 1
  %v1169 = vadd.f32 %v1167, %v1168
  %v1170 = vsub.f32 0.0, %v1147
  %v1171 = vsub.f32 0.0, %v1148
  %v1172 = vmul.f32 %v1170, 1.442695
  %v1173 = vpow.pop %v1172
  %v1174 = vmul.f32 %v1171, 1.442695
  %v1175 = vpow.pop %v1174
  %v1176 = vadd.f32 %v1173, 1.0
  %v1177 = vadd.f32 %v1175, 1.0
  %v1178 = vrcp.pop %v1176
  %v1179 = vrcp.pop %v1177
  %1181 = vset.pattern.permute.xlu0 0
  %1182 = vperm.xlu0 %1181, %v1029
  %v1183 = vpop.permute.xlu0 %1182
  %1186 = vset.pattern.permute.xlu0 0
  %1187 = vperm.xlu0 %1186, %v1030
  %v1188 = vpop.permute.xlu0 %1187
  %1191 = vset.pattern.permute.xlu0 0
  %1192 = vperm.xlu0 %1191, %v1178
  %v1193 = vpop.permute.xlu0 %1192
  %1196 = vset.pattern.permute.xlu0 0
  %1197 = vperm.xlu0 %1196, %v1179
  %v1198 = vpop.permute.xlu0 %1197
  %v1200 = vsel %vm1104, %v1193, 0.0
  %v1201 = vsel %vm1104, %v1198, 0.0
  %v1202 = vsel %vm1093, %v1183, %v1200
  %v1203 = vsel %vm1093, %v1188, %v1201
  %1204 = vst [vmem:[%s2 + $0x10] sm:$0xff] %v1202
  %1205 = vst [vmem:[%s2 + $0x18] sm:$0xff] %v1203
  %1206 = vst [vmem:[%s2 + $0x21] sm:$0x1] %v1169
  // Predicated region
  $region10: #{gpnet_vert_forward.1} parent=0 // pred_check
    _
  $region11: #{gpnet_vert_forward.1} parent=0 // pred_check_branch
    %1208 = sbr.rel (0) target = $region13
  $region12: #{gpnet_vert_forward.1} parent=0 // pred_region
    _
  $region13: #{gpnet_vert_forward.1} parent=0 // pred_fallthru
    _
  // Predicated region
  $region14: #{gpnet_vert_forward.1} parent=0 // pred_check
    _
  $region15: #{gpnet_vert_forward.1} parent=0 // pred_check_branch
    %1210 = sbr.rel (0) target = $region17
  $region16: #{gpnet_vert_forward.1} parent=0 // pred_region
    _
  $region17: #{gpnet_vert_forward.1} parent=0 // pred_fallthru
    _

</llo_original>
